<compile_context>
chip_gen: v7x
topology: tpu7x:2x2x1
jax: 0.10.0
libtpu: 0.0.40
codegen_flags: <defaults>
</compile_context>

<pallas_src>
import jax
import jax.numpy as jnp
from jax.experimental import pallas as pl
from jax.experimental.pallas import tpu as pltpu


def _pad_to(x, m):
    return ((x + m - 1) // m) * m


def _vmem_capacity_bytes():
    try:
        info = pltpu.get_tpu_info()
        cap = getattr(info, "vmem_capacity_bytes", None)
        if cap:
            return int(cap)
    except Exception:
        pass
    return 128 * 1024 * 1024  # v5e / v6e default


def _afl_kernel(z_ref, wbd_ref, bias_ref, qbd_ref, emat_ref, out_ref):
    # z_ref    : (bt, nw, chan*dim)        lane-dense input slab (z dtype)
    # wbd_ref  : (chan*dim, chan*hidden)   block-diagonal W_b^T (z dtype)
    # bias_ref : (1, chan*hidden)          tiled W_b bias       (f32)
    # qbd_ref  : (chan*hidden, chan)       block-diagonal q     (f32)
    # emat_ref : (chan, chan*dim)          channel->lane expansion (0/1, f32)
    # out_ref  : (bt, chan*dim)            lane-dense output slab
    bt, nw, cd = z_ref.shape
    wbd = wbd_ref[...]
    bias = bias_ref[...]
    qbd = qbd_ref[...]
    emat = emat_ref[...]

    # ---- pass 1: per-window attention logits (bt, chan) each -----------
    # K = chan*dim keeps the MXU lane-dense; the (bt, chan*hidden) h lives
    # only for one window (never a whole-block temporary).
    logits = []
    for w in range(nw):
        zw = z_ref[:, w, :]
        hw = jnp.tanh(
            jnp.dot(zw, wbd, preferred_element_type=jnp.float32) + bias)
        logits.append(jnp.dot(hw, qbd, preferred_element_type=jnp.float32))

    # ---- numerically-stable softmax over the window axis ----------------
    m = logits[0]
    for w in range(1, nw):
        m = jnp.maximum(m, logits[w])
    exps = [jnp.exp(logits[w] - m) for w in range(nw)]
    denom = exps[0]
    for w in range(1, nw):
        denom = denom + exps[w]
    inv = pl.reciprocal(denom, approx=False)  # exact: keeps weights normalized

    # ---- pass 2: unrolled weighted accumulate over windows --------------
    acc = jnp.zeros((bt, cd), jnp.float32)
    for w in range(nw):
        a_w = exps[w] * inv                                        # (bt, chan)
        a_lanes = jnp.dot(a_w, emat, preferred_element_type=jnp.float32)
        acc = acc + a_lanes * z_ref[:, w, :].astype(jnp.float32)
    out_ref[...] = acc.astype(out_ref.dtype)


def afl_reference(z, w_b, b_b, q_w):
    # Pure-JAX reference mirroring the PyTorch forward (also the fallback
    # for shapes where the block-diagonal weight would not fit VMEM).
    q_vec = jnp.asarray(q_w).reshape(-1)
    h = jnp.tanh(jnp.einsum("bwcd,hd->bwch", z, w_b) + b_b)   # (bs, nw, chan, hidden)
    a = jnp.einsum("bwch,h->bwc", h, q_vec)                   # (bs, nw, chan)
    a = jax.nn.softmax(a, axis=1)                             # softmax over nw
    return jnp.sum(z * a[..., None], axis=1)                  # (bs, chan, dim)


def afl_forward(z, w_b, b_b, q_w):
    bs, nw, chan, dim = z.shape
    hidden = w_b.shape[0]
    cd = chan * dim
    ch = chan * hidden
    in_dtype = z.dtype
    itemsize = jnp.dtype(in_dtype).itemsize

    # Block-diagonal weight must fit comfortably in VMEM.
    wbd_vmem = _pad_to(cd, 8) * _pad_to(ch, 128) * itemsize
    if wbd_vmem > 16 * 1024 * 1024:
        # TODO(synk): large chan*dim*hidden regime should keep per-channel MXU
        # matmuls with K/N padded to 128/256 instead of the block-diag trick.
        return afl_reference(z, w_b, b_b, q_w)

    # ---- one-time operand prep (free layout plumbing in XLA) ------------
    z_slab = z.reshape(bs, nw, cd)                      # contiguous view, no copy
    w32 = jnp.asarray(w_b, jnp.float32)
    q_vec = jnp.asarray(q_w, jnp.float32).reshape(hidden)
    eye_c = jnp.eye(chan, dtype=jnp.float32)
    wbd = jnp.kron(eye_c, w32.T).astype(in_dtype)                   # (cd, ch)
    bias = jnp.tile(jnp.asarray(b_b, jnp.float32), chan).reshape(1, ch)
    qbd = jnp.kron(eye_c, q_vec.reshape(hidden, 1))                 # (ch, chan)
    emat = jnp.kron(eye_c, jnp.ones((1, dim), jnp.float32))         # (chan, cd)

    # ---- generation-aware VMEM budget & batch-tile sizing ----------------
    vmem_cap = _vmem_capacity_bytes()                    # 64 MiB v7x, 128 MiB v5e/v6e
    vmem_limit = min(int(vmem_cap * 0.75), 96 * 1024 * 1024)
    budget = int(vmem_limit * 0.85)                      # headroom for compiler scratch

    nw_pad = _pad_to(nw, 8)
    cd_pad = _pad_to(cd, 128)
    ch_pad = _pad_to(ch, 128)
    # Real (8,128)-tile-padded per-batch-element footprint, temps included.
    per_b = (2 * nw_pad * cd_pad * itemsize      # double-buffered input block
             + 2 * cd_pad * itemsize             # double-buffered output block
             + 3 * cd_pad * 4                    # acc + zw f32 + a_lanes f32
             + 2 * nw * 128 * 4                  # logits + exps (chan lanes pad->128)
             + ch_pad * 4)                       # per-window h
    fixed = 2 * (_pad_to(cd, 8) * ch_pad * itemsize        # wbd
                 + _pad_to(ch, 8) * 128 * 4                 # qbd
                 + _pad_to(chan, 8) * cd_pad * 4            # emat
                 + 8 * ch_pad * 4)                          # bias
    bt = max(1, (budget - fixed) // per_b)
    if bt >= bs:
        if bs >= 16:
            # keep >=2 grid steps so v7x's two TensorCores both get work
            bt = min(bs, _pad_to((bs + 1) // 2, 8))
        else:
            bt = bs
    else:
        bt = min(bs, max(8, (bt // 8) * 8))      # sublane-aligned output rows
    grid = (pl.cdiv(bs, bt),)                    # partial last block: OOB output
                                                 # writes are masked by Pallas

    flops = int(2 * bs * nw * chan * dim * hidden       # W_b projection
                + 2 * bs * nw * chan * hidden            # q projection
                + 2 * bs * nw * chan * dim                # a expansion
                + 2 * bs * nw * chan * dim)               # weighted sum
    transcendentals = int(bs * nw * chan * (hidden + 1))  # tanh + exp
    bytes_accessed = int(z.size * itemsize + bs * cd * itemsize
                         + wbd.size * itemsize
                         + (qbd.size + emat.size + bias.size) * 4)

    out = pl.pallas_call(
        _afl_kernel,
        out_shape=jax.ShapeDtypeStruct((bs, cd), in_dtype),
        grid=grid,
        in_specs=[
            pl.BlockSpec((bt, nw, cd), lambda i: (i, 0, 0)),
            pl.BlockSpec((cd, ch), lambda i: (0, 0)),
            pl.BlockSpec((1, ch), lambda i: (0, 0)),
            pl.BlockSpec((ch, chan), lambda i: (0, 0)),
            pl.BlockSpec((chan, cd), lambda i: (0, 0)),
        ],
        out_specs=pl.BlockSpec((bt, cd), lambda i: (i, 0)),
        compiler_params=pltpu.CompilerParams(
            dimension_semantics=("parallel",),
            vmem_limit_bytes=vmem_limit,
        ),
        cost_estimate=pl.CostEstimate(
            flops=flops,
            transcendentals=transcendentals,
            bytes_accessed=bytes_accessed,
        ),
    )(z_slab, wbd, bias, qbd, emat)

    return out.reshape(bs, chan, dim)


if __name__ == "__main__":
    bs, nw, chan, dim = 2, 8, 4, 32
    hid_r = 4
    hidden = dim // hid_r

    key = jax.random.PRNGKey(0)
    kz, kw, kb, kq = jax.random.split(key, 4)
    z = jax.random.normal(kz, (bs, nw, chan, dim), dtype=jnp.float32)
    w_b = jax.random.normal(kw, (hidden, dim), dtype=jnp.float32) * 0.1
    b_b = jax.random.normal(kb, (hidden,), dtype=jnp.float32) * 0.1
    q_w = jax.random.normal(kq, (1, hidden), dtype=jnp.float32) * 0.1

    out = jax.block_until_ready(afl_forward(z, w_b, b_b, q_w))
    ref = afl_reference(z, w_b, b_b, q_w)

    assert out.shape == (bs, chan, dim)
    assert jnp.allclose(out, ref, atol=5e-3, rtol=5e-3), "mismatch vs reference"
    print("KERNEL_OK")
</pallas_src>

<mosaic_0001>
module attributes {stable_mosaic.version = 11 : i64} {
  func.func @_afl_kernel(%arg0: i32, %arg1: memref<2x8x128xf32, #tpu.memory_space<vmem>>, %arg2: memref<128x32xf32, #tpu.memory_space<vmem>>, %arg3: memref<1x32xf32, #tpu.memory_space<vmem>>, %arg4: memref<32x4xf32, #tpu.memory_space<vmem>>, %arg5: memref<4x128xf32, #tpu.memory_space<vmem>>, %arg6: memref<2x128xf32, #tpu.memory_space<vmem>>) attributes {dimension_semantics = [#tpu.dimension_semantics<parallel>], iteration_bounds = array<i64: 1>, scalar_prefetch = 0 : i64, scratch_operands = 0 : i64, tpu.core_type = #tpu.core_type<tc>, window_params = [{transform_indices = @transform_0, window_bounds = array<i64: 2, 8, 128>}, {pipeline_mode = #tpu.pipeline_mode<synchronous>, transform_indices = @transform_1, window_bounds = array<i64: 128, 32>}, {pipeline_mode = #tpu.pipeline_mode<synchronous>, transform_indices = @transform_2, window_bounds = array<i64: 1, 32>}, {pipeline_mode = #tpu.pipeline_mode<synchronous>, transform_indices = @transform_3, window_bounds = array<i64: 32, 4>}, {pipeline_mode = #tpu.pipeline_mode<synchronous>, transform_indices = @transform_4, window_bounds = array<i64: 4, 128>}, {transform_indices = @transform_5, window_bounds = array<i64: 2, 128>}]} {
    %c0 = arith.constant 0 : index
    %c0_0 = arith.constant 0 : index
    %0 = vector.load %arg2[%c0, %c0_0] : memref<128x32xf32, #tpu.memory_space<vmem>>, vector<128x32xf32>
    %c0_1 = arith.constant 0 : index
    %c0_2 = arith.constant 0 : index
    %1 = vector.load %arg3[%c0_1, %c0_2] : memref<1x32xf32, #tpu.memory_space<vmem>>, vector<1x32xf32>
    %c0_3 = arith.constant 0 : index
    %c0_4 = arith.constant 0 : index
    %2 = vector.load %arg4[%c0_3, %c0_4] : memref<32x4xf32, #tpu.memory_space<vmem>>, vector<32x4xf32>
    %c0_5 = arith.constant 0 : index
    %c0_6 = arith.constant 0 : index
    %3 = vector.load %arg5[%c0_5, %c0_6] : memref<4x128xf32, #tpu.memory_space<vmem>>, vector<4x128xf32>
    %c0_7 = arith.constant 0 : index
    %c0_8 = arith.constant 0 : index
    %c0_9 = arith.constant 0 : index
    %4 = vector.load %arg1[%c0_7, %c0_8, %c0_9] : memref<2x8x128xf32, #tpu.memory_space<vmem>>, vector<2x1x128xf32>
    %5 = vector.shape_cast %4 : vector<2x1x128xf32> to vector<2x128xf32>
    %cst = arith.constant dense<0.000000e+00> : vector<2x32xf32>
    %6 = tpu.matmul %5, %0, %cst {dimension_numbers = #tpu.dot_dimension_numbers<[1], [0], [0], [1], [0, 0, 1, 1], [], []>} : vector<2x128xf32>, vector<128x32xf32>, vector<2x32xf32> -> vector<2x32xf32>
    %7 = vector.broadcast %1 : vector<1x32xf32> to vector<2x32xf32>
    %8 = arith.addf %6, %7 : vector<2x32xf32>
    %9 = math.tanh %8 : vector<2x32xf32>
    %cst_10 = arith.constant dense<0.000000e+00> : vector<2x4xf32>
    %10 = tpu.matmul %9, %2, %cst_10 {dimension_numbers = #tpu.dot_dimension_numbers<[1], [0], [0], [1], [0, 0, 1, 1], [], []>} : vector<2x32xf32>, vector<32x4xf32>, vector<2x4xf32> -> vector<2x4xf32>
    %c0_11 = arith.constant 0 : index
    %c1 = arith.constant 1 : index
    %c0_12 = arith.constant 0 : index
    %11 = vector.load %arg1[%c0_11, %c1, %c0_12] : memref<2x8x128xf32, #tpu.memory_space<vmem>>, vector<2x1x128xf32>
    %12 = vector.shape_cast %11 : vector<2x1x128xf32> to vector<2x128xf32>
    %cst_13 = arith.constant dense<0.000000e+00> : vector<2x32xf32>
    %13 = tpu.matmul %12, %0, %cst_13 {dimension_numbers = #tpu.dot_dimension_numbers<[1], [0], [0], [1], [0, 0, 1, 1], [], []>} : vector<2x128xf32>, vector<128x32xf32>, vector<2x32xf32> -> vector<2x32xf32>
    %14 = vector.broadcast %1 : vector<1x32xf32> to vector<2x32xf32>
    %15 = arith.addf %13, %14 : vector<2x32xf32>
    %16 = math.tanh %15 : vector<2x32xf32>
    %cst_14 = arith.constant dense<0.000000e+00> : vector<2x4xf32>
    %17 = tpu.matmul %16, %2, %cst_14 {dimension_numbers = #tpu.dot_dimension_numbers<[1], [0], [0], [1], [0, 0, 1, 1], [], []>} : vector<2x32xf32>, vector<32x4xf32>, vector<2x4xf32> -> vector<2x4xf32>
    %c0_15 = arith.constant 0 : index
    %c2 = arith.constant 2 : index
    %c0_16 = arith.constant 0 : index
    %18 = vector.load %arg1[%c0_15, %c2, %c0_16] : memref<2x8x128xf32, #tpu.memory_space<vmem>>, vector<2x1x128xf32>
    %19 = vector.shape_cast %18 : vector<2x1x128xf32> to vector<2x128xf32>
    %cst_17 = arith.constant dense<0.000000e+00> : vector<2x32xf32>
    %20 = tpu.matmul %19, %0, %cst_17 {dimension_numbers = #tpu.dot_dimension_numbers<[1], [0], [0], [1], [0, 0, 1, 1], [], []>} : vector<2x128xf32>, vector<128x32xf32>, vector<2x32xf32> -> vector<2x32xf32>
    %21 = vector.broadcast %1 : vector<1x32xf32> to vector<2x32xf32>
    %22 = arith.addf %20, %21 : vector<2x32xf32>
    %23 = math.tanh %22 : vector<2x32xf32>
    %cst_18 = arith.constant dense<0.000000e+00> : vector<2x4xf32>
    %24 = tpu.matmul %23, %2, %cst_18 {dimension_numbers = #tpu.dot_dimension_numbers<[1], [0], [0], [1], [0, 0, 1, 1], [], []>} : vector<2x32xf32>, vector<32x4xf32>, vector<2x4xf32> -> vector<2x4xf32>
    %c0_19 = arith.constant 0 : index
    %c3 = arith.constant 3 : index
    %c0_20 = arith.constant 0 : index
    %25 = vector.load %arg1[%c0_19, %c3, %c0_20] : memref<2x8x128xf32, #tpu.memory_space<vmem>>, vector<2x1x128xf32>
    %26 = vector.shape_cast %25 : vector<2x1x128xf32> to vector<2x128xf32>
    %cst_21 = arith.constant dense<0.000000e+00> : vector<2x32xf32>
    %27 = tpu.matmul %26, %0, %cst_21 {dimension_numbers = #tpu.dot_dimension_numbers<[1], [0], [0], [1], [0, 0, 1, 1], [], []>} : vector<2x128xf32>, vector<128x32xf32>, vector<2x32xf32> -> vector<2x32xf32>
    %28 = vector.broadcast %1 : vector<1x32xf32> to vector<2x32xf32>
    %29 = arith.addf %27, %28 : vector<2x32xf32>
    %30 = math.tanh %29 : vector<2x32xf32>
    %cst_22 = arith.constant dense<0.000000e+00> : vector<2x4xf32>
    %31 = tpu.matmul %30, %2, %cst_22 {dimension_numbers = #tpu.dot_dimension_numbers<[1], [0], [0], [1], [0, 0, 1, 1], [], []>} : vector<2x32xf32>, vector<32x4xf32>, vector<2x4xf32> -> vector<2x4xf32>
    %c0_23 = arith.constant 0 : index
    %c4 = arith.constant 4 : index
    %c0_24 = arith.constant 0 : index
    %32 = vector.load %arg1[%c0_23, %c4, %c0_24] : memref<2x8x128xf32, #tpu.memory_space<vmem>>, vector<2x1x128xf32>
    %33 = vector.shape_cast %32 : vector<2x1x128xf32> to vector<2x128xf32>
    %cst_25 = arith.constant dense<0.000000e+00> : vector<2x32xf32>
    %34 = tpu.matmul %33, %0, %cst_25 {dimension_numbers = #tpu.dot_dimension_numbers<[1], [0], [0], [1], [0, 0, 1, 1], [], []>} : vector<2x128xf32>, vector<128x32xf32>, vector<2x32xf32> -> vector<2x32xf32>
    %35 = vector.broadcast %1 : vector<1x32xf32> to vector<2x32xf32>
    %36 = arith.addf %34, %35 : vector<2x32xf32>
    %37 = math.tanh %36 : vector<2x32xf32>
    %cst_26 = arith.constant dense<0.000000e+00> : vector<2x4xf32>
    %38 = tpu.matmul %37, %2, %cst_26 {dimension_numbers = #tpu.dot_dimension_numbers<[1], [0], [0], [1], [0, 0, 1, 1], [], []>} : vector<2x32xf32>, vector<32x4xf32>, vector<2x4xf32> -> vector<2x4xf32>
    %c0_27 = arith.constant 0 : index
    %c5 = arith.constant 5 : index
    %c0_28 = arith.constant 0 : index
    %39 = vector.load %arg1[%c0_27, %c5, %c0_28] : memref<2x8x128xf32, #tpu.memory_space<vmem>>, vector<2x1x128xf32>
    %40 = vector.shape_cast %39 : vector<2x1x128xf32> to vector<2x128xf32>
    %cst_29 = arith.constant dense<0.000000e+00> : vector<2x32xf32>
    %41 = tpu.matmul %40, %0, %cst_29 {dimension_numbers = #tpu.dot_dimension_numbers<[1], [0], [0], [1], [0, 0, 1, 1], [], []>} : vector<2x128xf32>, vector<128x32xf32>, vector<2x32xf32> -> vector<2x32xf32>
    %42 = vector.broadcast %1 : vector<1x32xf32> to vector<2x32xf32>
    %43 = arith.addf %41, %42 : vector<2x32xf32>
    %44 = math.tanh %43 : vector<2x32xf32>
    %cst_30 = arith.constant dense<0.000000e+00> : vector<2x4xf32>
    %45 = tpu.matmul %44, %2, %cst_30 {dimension_numbers = #tpu.dot_dimension_numbers<[1], [0], [0], [1], [0, 0, 1, 1], [], []>} : vector<2x32xf32>, vector<32x4xf32>, vector<2x4xf32> -> vector<2x4xf32>
    %c0_31 = arith.constant 0 : index
    %c6 = arith.constant 6 : index
    %c0_32 = arith.constant 0 : index
    %46 = vector.load %arg1[%c0_31, %c6, %c0_32] : memref<2x8x128xf32, #tpu.memory_space<vmem>>, vector<2x1x128xf32>
    %47 = vector.shape_cast %46 : vector<2x1x128xf32> to vector<2x128xf32>
    %cst_33 = arith.constant dense<0.000000e+00> : vector<2x32xf32>
    %48 = tpu.matmul %47, %0, %cst_33 {dimension_numbers = #tpu.dot_dimension_numbers<[1], [0], [0], [1], [0, 0, 1, 1], [], []>} : vector<2x128xf32>, vector<128x32xf32>, vector<2x32xf32> -> vector<2x32xf32>
    %49 = vector.broadcast %1 : vector<1x32xf32> to vector<2x32xf32>
    %50 = arith.addf %48, %49 : vector<2x32xf32>
    %51 = math.tanh %50 : vector<2x32xf32>
    %cst_34 = arith.constant dense<0.000000e+00> : vector<2x4xf32>
    %52 = tpu.matmul %51, %2, %cst_34 {dimension_numbers = #tpu.dot_dimension_numbers<[1], [0], [0], [1], [0, 0, 1, 1], [], []>} : vector<2x32xf32>, vector<32x4xf32>, vector<2x4xf32> -> vector<2x4xf32>
    %c0_35 = arith.constant 0 : index
    %c7 = arith.constant 7 : index
    %c0_36 = arith.constant 0 : index
    %53 = vector.load %arg1[%c0_35, %c7, %c0_36] : memref<2x8x128xf32, #tpu.memory_space<vmem>>, vector<2x1x128xf32>
    %54 = vector.shape_cast %53 : vector<2x1x128xf32> to vector<2x128xf32>
    %cst_37 = arith.constant dense<0.000000e+00> : vector<2x32xf32>
    %55 = tpu.matmul %54, %0, %cst_37 {dimension_numbers = #tpu.dot_dimension_numbers<[1], [0], [0], [1], [0, 0, 1, 1], [], []>} : vector<2x128xf32>, vector<128x32xf32>, vector<2x32xf32> -> vector<2x32xf32>
    %56 = vector.broadcast %1 : vector<1x32xf32> to vector<2x32xf32>
    %57 = arith.addf %55, %56 : vector<2x32xf32>
    %58 = math.tanh %57 : vector<2x32xf32>
    %cst_38 = arith.constant dense<0.000000e+00> : vector<2x4xf32>
    %59 = tpu.matmul %58, %2, %cst_38 {dimension_numbers = #tpu.dot_dimension_numbers<[1], [0], [0], [1], [0, 0, 1, 1], [], []>} : vector<2x32xf32>, vector<32x4xf32>, vector<2x4xf32> -> vector<2x4xf32>
    %60 = arith.maximumf %10, %17 : vector<2x4xf32>
    %61 = arith.maximumf %60, %24 : vector<2x4xf32>
    %62 = arith.maximumf %61, %31 : vector<2x4xf32>
    %63 = arith.maximumf %62, %38 : vector<2x4xf32>
    %64 = arith.maximumf %63, %45 : vector<2x4xf32>
    %65 = arith.maximumf %64, %52 : vector<2x4xf32>
    %66 = arith.maximumf %65, %59 : vector<2x4xf32>
    %67 = arith.subf %10, %66 : vector<2x4xf32>
    %68 = math.exp %67 : vector<2x4xf32>
    %69 = arith.subf %17, %66 : vector<2x4xf32>
    %70 = math.exp %69 : vector<2x4xf32>
    %71 = arith.subf %24, %66 : vector<2x4xf32>
    %72 = math.exp %71 : vector<2x4xf32>
    %73 = arith.subf %31, %66 : vector<2x4xf32>
    %74 = math.exp %73 : vector<2x4xf32>
    %75 = arith.subf %38, %66 : vector<2x4xf32>
    %76 = math.exp %75 : vector<2x4xf32>
    %77 = arith.subf %45, %66 : vector<2x4xf32>
    %78 = math.exp %77 : vector<2x4xf32>
    %79 = arith.subf %52, %66 : vector<2x4xf32>
    %80 = math.exp %79 : vector<2x4xf32>
    %81 = arith.subf %59, %66 : vector<2x4xf32>
    %82 = math.exp %81 : vector<2x4xf32>
    %83 = arith.addf %68, %70 : vector<2x4xf32>
    %84 = arith.addf %83, %72 : vector<2x4xf32>
    %85 = arith.addf %84, %74 : vector<2x4xf32>
    %86 = arith.addf %85, %76 : vector<2x4xf32>
    %87 = arith.addf %86, %78 : vector<2x4xf32>
    %88 = arith.addf %87, %80 : vector<2x4xf32>
    %89 = arith.addf %88, %82 : vector<2x4xf32>
    %90 = tpu.reciprocal %89 : vector<2x4xf32> -> vector<2x4xf32>
    %cst_39 = arith.constant 0.000000e+00 : f32
    %91 = vector.broadcast %cst_39 : f32 to vector<2x128xf32>
    %92 = arith.mulf %68, %90 : vector<2x4xf32>
    %cst_40 = arith.constant dense<0.000000e+00> : vector<2x128xf32>
    %93 = tpu.matmul %92, %3, %cst_40 {dimension_numbers = #tpu.dot_dimension_numbers<[1], [0], [0], [1], [0, 0, 1, 1], [], []>} : vector<2x4xf32>, vector<4x128xf32>, vector<2x128xf32> -> vector<2x128xf32>
    %c0_41 = arith.constant 0 : index
    %c0_42 = arith.constant 0 : index
    %c0_43 = arith.constant 0 : index
    %94 = vector.load %arg1[%c0_41, %c0_42, %c0_43] : memref<2x8x128xf32, #tpu.memory_space<vmem>>, vector<2x1x128xf32>
    %95 = vector.shape_cast %94 : vector<2x1x128xf32> to vector<2x128xf32>
    %96 = arith.mulf %93, %95 : vector<2x128xf32>
    %97 = arith.addf %91, %96 : vector<2x128xf32>
    %98 = arith.mulf %70, %90 : vector<2x4xf32>
    %cst_44 = arith.constant dense<0.000000e+00> : vector<2x128xf32>
    %99 = tpu.matmul %98, %3, %cst_44 {dimension_numbers = #tpu.dot_dimension_numbers<[1], [0], [0], [1], [0, 0, 1, 1], [], []>} : vector<2x4xf32>, vector<4x128xf32>, vector<2x128xf32> -> vector<2x128xf32>
    %c0_45 = arith.constant 0 : index
    %c1_46 = arith.constant 1 : index
    %c0_47 = arith.constant 0 : index
    %100 = vector.load %arg1[%c0_45, %c1_46, %c0_47] : memref<2x8x128xf32, #tpu.memory_space<vmem>>, vector<2x1x128xf32>
    %101 = vector.shape_cast %100 : vector<2x1x128xf32> to vector<2x128xf32>
    %102 = arith.mulf %99, %101 : vector<2x128xf32>
    %103 = arith.addf %97, %102 : vector<2x128xf32>
    %104 = arith.mulf %72, %90 : vector<2x4xf32>
    %cst_48 = arith.constant dense<0.000000e+00> : vector<2x128xf32>
    %105 = tpu.matmul %104, %3, %cst_48 {dimension_numbers = #tpu.dot_dimension_numbers<[1], [0], [0], [1], [0, 0, 1, 1], [], []>} : vector<2x4xf32>, vector<4x128xf32>, vector<2x128xf32> -> vector<2x128xf32>
    %c0_49 = arith.constant 0 : index
    %c2_50 = arith.constant 2 : index
    %c0_51 = arith.constant 0 : index
    %106 = vector.load %arg1[%c0_49, %c2_50, %c0_51] : memref<2x8x128xf32, #tpu.memory_space<vmem>>, vector<2x1x128xf32>
    %107 = vector.shape_cast %106 : vector<2x1x128xf32> to vector<2x128xf32>
    %108 = arith.mulf %105, %107 : vector<2x128xf32>
    %109 = arith.addf %103, %108 : vector<2x128xf32>
    %110 = arith.mulf %74, %90 : vector<2x4xf32>
    %cst_52 = arith.constant dense<0.000000e+00> : vector<2x128xf32>
    %111 = tpu.matmul %110, %3, %cst_52 {dimension_numbers = #tpu.dot_dimension_numbers<[1], [0], [0], [1], [0, 0, 1, 1], [], []>} : vector<2x4xf32>, vector<4x128xf32>, vector<2x128xf32> -> vector<2x128xf32>
    %c0_53 = arith.constant 0 : index
    %c3_54 = arith.constant 3 : index
    %c0_55 = arith.constant 0 : index
    %112 = vector.load %arg1[%c0_53, %c3_54, %c0_55] : memref<2x8x128xf32, #tpu.memory_space<vmem>>, vector<2x1x128xf32>
    %113 = vector.shape_cast %112 : vector<2x1x128xf32> to vector<2x128xf32>
    %114 = arith.mulf %111, %113 : vector<2x128xf32>
    %115 = arith.addf %109, %114 : vector<2x128xf32>
    %116 = arith.mulf %76, %90 : vector<2x4xf32>
    %cst_56 = arith.constant dense<0.000000e+00> : vector<2x128xf32>
    %117 = tpu.matmul %116, %3, %cst_56 {dimension_numbers = #tpu.dot_dimension_numbers<[1], [0], [0], [1], [0, 0, 1, 1], [], []>} : vector<2x4xf32>, vector<4x128xf32>, vector<2x128xf32> -> vector<2x128xf32>
    %c0_57 = arith.constant 0 : index
    %c4_58 = arith.constant 4 : index
    %c0_59 = arith.constant 0 : index
    %118 = vector.load %arg1[%c0_57, %c4_58, %c0_59] : memref<2x8x128xf32, #tpu.memory_space<vmem>>, vector<2x1x128xf32>
    %119 = vector.shape_cast %118 : vector<2x1x128xf32> to vector<2x128xf32>
    %120 = arith.mulf %117, %119 : vector<2x128xf32>
    %121 = arith.addf %115, %120 : vector<2x128xf32>
    %122 = arith.mulf %78, %90 : vector<2x4xf32>
    %cst_60 = arith.constant dense<0.000000e+00> : vector<2x128xf32>
    %123 = tpu.matmul %122, %3, %cst_60 {dimension_numbers = #tpu.dot_dimension_numbers<[1], [0], [0], [1], [0, 0, 1, 1], [], []>} : vector<2x4xf32>, vector<4x128xf32>, vector<2x128xf32> -> vector<2x128xf32>
    %c0_61 = arith.constant 0 : index
    %c5_62 = arith.constant 5 : index
    %c0_63 = arith.constant 0 : index
    %124 = vector.load %arg1[%c0_61, %c5_62, %c0_63] : memref<2x8x128xf32, #tpu.memory_space<vmem>>, vector<2x1x128xf32>
    %125 = vector.shape_cast %124 : vector<2x1x128xf32> to vector<2x128xf32>
    %126 = arith.mulf %123, %125 : vector<2x128xf32>
    %127 = arith.addf %121, %126 : vector<2x128xf32>
    %128 = arith.mulf %80, %90 : vector<2x4xf32>
    %cst_64 = arith.constant dense<0.000000e+00> : vector<2x128xf32>
    %129 = tpu.matmul %128, %3, %cst_64 {dimension_numbers = #tpu.dot_dimension_numbers<[1], [0], [0], [1], [0, 0, 1, 1], [], []>} : vector<2x4xf32>, vector<4x128xf32>, vector<2x128xf32> -> vector<2x128xf32>
    %c0_65 = arith.constant 0 : index
    %c6_66 = arith.constant 6 : index
    %c0_67 = arith.constant 0 : index
    %130 = vector.load %arg1[%c0_65, %c6_66, %c0_67] : memref<2x8x128xf32, #tpu.memory_space<vmem>>, vector<2x1x128xf32>
    %131 = vector.shape_cast %130 : vector<2x1x128xf32> to vector<2x128xf32>
    %132 = arith.mulf %129, %131 : vector<2x128xf32>
    %133 = arith.addf %127, %132 : vector<2x128xf32>
    %134 = arith.mulf %82, %90 : vector<2x4xf32>
    %cst_68 = arith.constant dense<0.000000e+00> : vector<2x128xf32>
    %135 = tpu.matmul %134, %3, %cst_68 {dimension_numbers = #tpu.dot_dimension_numbers<[1], [0], [0], [1], [0, 0, 1, 1], [], []>} : vector<2x4xf32>, vector<4x128xf32>, vector<2x128xf32> -> vector<2x128xf32>
    %c0_69 = arith.constant 0 : index
    %c7_70 = arith.constant 7 : index
    %c0_71 = arith.constant 0 : index
    %136 = vector.load %arg1[%c0_69, %c7_70, %c0_71] : memref<2x8x128xf32, #tpu.memory_space<vmem>>, vector<2x1x128xf32>
    %137 = vector.shape_cast %136 : vector<2x1x128xf32> to vector<2x128xf32>
    %138 = arith.mulf %135, %137 : vector<2x128xf32>
    %139 = arith.addf %133, %138 : vector<2x128xf32>
    %c0_72 = arith.constant 0 : index
    %c0_73 = arith.constant 0 : index
    %140 = vector.load %arg6[%c0_72, %c0_73] : memref<2x128xf32, #tpu.memory_space<vmem>>, vector<2x128xf32>
    tpu.vector_store %arg6[%c0_72, %c0_73], %139 {strides = array<i32>} : memref<2x128xf32, #tpu.memory_space<vmem>>, vector<2x128xf32>,
    return
  }
  func.func @transform_0(%arg0: i32) -> (i32, i32, i32) {
    %c0_i32 = arith.constant 0 : i32
    %c0_i32_0 = arith.constant 0 : i32
    %c0_i32_1 = arith.constant 0 : i32
    return %arg0, %c0_i32, %c0_i32_0 : i32, i32, i32
  }
  func.func @transform_1(%arg0: i32) -> (i32, i32) {
    %c0_i32 = arith.constant 0 : i32
    %c0_i32_0 = arith.constant 0 : i32
    %c0_i32_1 = arith.constant 0 : i32
    return %c0_i32, %c0_i32_0 : i32, i32
  }
  func.func @transform_2(%arg0: i32) -> (i32, i32) {
    %c0_i32 = arith.constant 0 : i32
    %c0_i32_0 = arith.constant 0 : i32
    %c0_i32_1 = arith.constant 0 : i32
    return %c0_i32, %c0_i32_0 : i32, i32
  }
  func.func @transform_3(%arg0: i32) -> (i32, i32) {
    %c0_i32 = arith.constant 0 : i32
    %c0_i32_0 = arith.constant 0 : i32
    %c0_i32_1 = arith.constant 0 : i32
    return %c0_i32, %c0_i32_0 : i32, i32
  }
  func.func @transform_4(%arg0: i32) -> (i32, i32) {
    %c0_i32 = arith.constant 0 : i32
    %c0_i32_0 = arith.constant 0 : i32
    %c0_i32_1 = arith.constant 0 : i32
    return %c0_i32, %c0_i32_0 : i32, i32
  }
  func.func @transform_5(%arg0: i32) -> (i32, i32) {
    %c0_i32 = arith.constant 0 : i32
    %c0_i32_0 = arith.constant 0 : i32
    return %arg0, %c0_i32 : i32, i32
  }
}

</mosaic_0001>

<llo_original>
// kernel: tpu_custom_call.1
$region0: #{tpu_custom_call.1}
  #allocation0 [shape = 'u32[]', space=smem, size = 0x4, offset = 0x4, fixed_abs, tag = 'smem constant byte address 0x4 - core index']
  #allocation1 [shape = 'u32[144,128]{1,0:T(1,128)}', space=vmem, size = 0x12000, scoped, tag = 'internal scratch']
  %s0 = inlined_call_operand.hbm [shape: f32[2,8,128], index: 0, kind: input, shape index: {}]
  %s1 = inlined_call_operand.hbm [shape: f32[128,32], index: 1, kind: input, shape index: {}]
  %s2 = inlined_call_operand.hbm [shape: f32[1,32], index: 2, kind: input, shape index: {}]
  %s3 = inlined_call_operand.hbm [shape: f32[32,4], index: 3, kind: input, shape index: {}]
  %s4 = inlined_call_operand.hbm [shape: f32[4,128], index: 4, kind: input, shape index: {}]
  %s5 = inlined_call_operand.hbm [shape: f32[2,128], index: 5, kind: output, shape index: {}]
  %s6 = sld [smem:[#allocation0]]
  $region50: #{tpu_custom_call.1} parent=0
    _
  %s8 = ssub.s32 1, %s6
  %s9 = scalar_select 0, %s8, %s6
  $region1: #{tpu_custom_call.1} parent=0
    #allocation2 [shape = 'u8[8192]{0}', space=vmem, size = 0x2000, scoped, tag = 'input window, operand 0, single buffered']
    #allocation3 [shape = 's32[1]{0}', space=sflag, size = 0x4, scoped, tag = 'scoped memory for tpu_custom_call.1']
    #allocation4 [shape = 's32[1]{0}', space=sflag, size = 0x4, scoped, tag = 'scoped memory for tpu_custom_call.1']
    #allocation5 [shape = 'u8[65536]{0}', space=vmem, size = 0x10000, scoped, tag = 'input window, operand 1, single buffered']
    #allocation6 [shape = 's32[1]{0}', space=sflag, size = 0x4, scoped, tag = 'scoped memory for tpu_custom_call.1']
    #allocation7 [shape = 'u8[512]{0}', space=vmem, size = 0x400, scoped, tag = 'input window, operand 2, single buffered']
    #allocation8 [shape = 'u8[16384]{0}', space=vmem, size = 0x4000, scoped, tag = 'input window, operand 3, single buffered']
    #allocation9 [shape = 's32[1]{0}', space=sflag, size = 0x4, scoped, tag = 'scoped memory for tpu_custom_call.1']
    #allocation10 [shape = 'u8[2048]{0}', space=vmem, size = 0x800, scoped, tag = 'input window, operand 4, single buffered']
    #allocation11 [shape = 'u8[1024]{0}', space=vmem, size = 0x400, scoped, tag = 'output window, operand 0, single buffered']
    %10 = vsyncpa [#allocation3], 0
    %11 = vsyncpa [#allocation6], 0
    %12 = vsyncpa [#allocation9], 0
    %13 = vsyncpa [#allocation4], 0
    // Predicated region
    $region2: #{tpu_custom_call.1} parent=1 // pred_check
      _
    $region3: #{tpu_custom_call.1} parent=1 // pred_check_branch
      %15 = sbr.rel (0) target = $region5
    $region4: #{tpu_custom_call.1} parent=1 // pred_region
      %s17 = ssub.s32 256, 256
      %18 = vsyncadd [#allocation3], %s17
      %s19 = sshll.u32 [#allocation2], 4
      %s20 = int_to_ptr.vmem [resolvable:$true] %s19
      %25 = dma.hbm_to_vmem [thread:$0]  %s0, 256, %s20, [#allocation3], 128, 128, 8
    $region5: #{tpu_custom_call.1} parent=1 // pred_fallthru
      _
    // Predicated region
    $region6: #{tpu_custom_call.1} parent=1 // pred_check
      _
    $region7: #{tpu_custom_call.1} parent=1 // pred_check_branch
      %27 = sbr.rel (0) target = $region9
    $region8: #{tpu_custom_call.1} parent=1 // pred_region
      %s29 = ssub.s32 2048, 2048
      %30 = vsyncadd [#allocation6], %s29
      %s31 = sshll.u32 [#allocation5], 4
      %s32 = int_to_ptr.vmem [resolvable:$true] %s31
      %37 = dma.hbm_to_vmem [thread:$0]  %s1, 2048, %s32, [#allocation6], 128, 128, 8
    $region9: #{tpu_custom_call.1} parent=1 // pred_fallthru
      _
    // Predicated region
    $region10: #{tpu_custom_call.1} parent=1 // pred_check
      _
    $region11: #{tpu_custom_call.1} parent=1 // pred_check_branch
      %39 = sbr.rel (0) target = $region13
    $region12: #{tpu_custom_call.1} parent=1 // pred_region
      %s41 = ssub.s32 16, 16
      %42 = vsyncadd [#allocation6], %s41
      %s44 = sshll.u32 [#allocation7], 4
      %s45 = int_to_ptr.vmem [resolvable:$true] %s44
      %47 = dma.hbm_to_vmem [thread:$0]  %s2, 16, %s45, [#allocation6]
    $region13: #{tpu_custom_call.1} parent=1 // pred_fallthru
      _
    // Predicated region
    $region14: #{tpu_custom_call.1} parent=1 // pred_check
      _
    $region15: #{tpu_custom_call.1} parent=1 // pred_check_branch
      %49 = sbr.rel (0) target = $region17
    $region16: #{tpu_custom_call.1} parent=1 // pred_region
      %s51 = ssub.s32 512, 512
      %52 = vsyncadd [#allocation9], %s51
      %s53 = sshll.u32 [#allocation8], 4
      %s54 = int_to_ptr.vmem [resolvable:$true] %s53
      %59 = dma.hbm_to_vmem [thread:$0]  %s3, 512, %s54, [#allocation9], 128, 128, 8
    $region17: #{tpu_custom_call.1} parent=1 // pred_fallthru
      _
    // Predicated region
    $region18: #{tpu_custom_call.1} parent=1 // pred_check
      _
    $region19: #{tpu_custom_call.1} parent=1 // pred_check_branch
      %61 = sbr.rel (0) target = $region21
    $region20: #{tpu_custom_call.1} parent=1 // pred_region
      %s63 = ssub.s32 64, 64
      %64 = vsyncadd [#allocation9], %s63
      %s66 = sshll.u32 [#allocation10], 4
      %s67 = int_to_ptr.vmem [resolvable:$true] %s66
      %69 = dma.hbm_to_vmem [thread:$0]  %s4, 64, %s67, [#allocation9]
    $region21: #{tpu_custom_call.1} parent=1 // pred_fallthru
      _
    // Predicated region
    $region22: #{tpu_custom_call.1} parent=1 // pred_check
      _
    $region23: #{tpu_custom_call.1} parent=1 // pred_check_branch
      %71 = sbr.rel (0) target = $region25
    $region24: #{tpu_custom_call.1} parent=1 // pred_region
      %72 = dma.done [#allocation3], 256
    $region25: #{tpu_custom_call.1} parent=1 // pred_fallthru
      _
    // Predicated region
    $region26: #{tpu_custom_call.1} parent=1 // pred_check
      _
    $region27: #{tpu_custom_call.1} parent=1 // pred_check_branch
      %74 = sbr.rel (0) target = $region29
    $region28: #{tpu_custom_call.1} parent=1 // pred_region
      %75 = dma.done [#allocation6], 2048
    $region29: #{tpu_custom_call.1} parent=1 // pred_fallthru
      _
    // Predicated region
    $region30: #{tpu_custom_call.1} parent=1 // pred_check
      _
    $region31: #{tpu_custom_call.1} parent=1 // pred_check_branch
      %77 = sbr.rel (0) target = $region33
    $region32: #{tpu_custom_call.1} parent=1 // pred_region
      %78 = dma.done [#allocation6], 16
    $region33: #{tpu_custom_call.1} parent=1 // pred_fallthru
      _
    // Predicated region
    $region34: #{tpu_custom_call.1} parent=1 // pred_check
      _
    $region35: #{tpu_custom_call.1} parent=1 // pred_check_branch
      %80 = sbr.rel (0) target = $region37
    $region36: #{tpu_custom_call.1} parent=1 // pred_region
      %81 = dma.done [#allocation9], 512
    $region37: #{tpu_custom_call.1} parent=1 // pred_fallthru
      _
    // Predicated region
    $region38: #{tpu_custom_call.1} parent=1 // pred_check
      _
    $region39: #{tpu_custom_call.1} parent=1 // pred_check_branch
      %83 = sbr.rel (0) target = $region41
    $region40: #{tpu_custom_call.1} parent=1 // pred_region
      %84 = dma.done [#allocation9], 64
    $region41: #{tpu_custom_call.1} parent=1 // pred_fallthru
      _
    %v85 = vld [vmem:[#allocation5] sm:$0xff]
    %v86 = vld [vmem:[#allocation5 + $0x8] sm:$0xff]
    %v87 = vld [vmem:[#allocation5 + $0x10] sm:$0xff]
    %v88 = vld [vmem:[#allocation5 + $0x18] sm:$0xff]
    %v89 = vld [vmem:[#allocation5 + $0x20] sm:$0xff]
    %v90 = vld [vmem:[#allocation5 + $0x28] sm:$0xff]
    %v91 = vld [vmem:[#allocation5 + $0x30] sm:$0xff]
    %v92 = vld [vmem:[#allocation5 + $0x38] sm:$0xff]
    %v93 = vld [vmem:[#allocation5 + $0x40] sm:$0xff]
    %v94 = vld [vmem:[#allocation5 + $0x48] sm:$0xff]
    %v95 = vld [vmem:[#allocation5 + $0x50] sm:$0xff]
    %v96 = vld [vmem:[#allocation5 + $0x58] sm:$0xff]
    %v97 = vld [vmem:[#allocation5 + $0x60] sm:$0xff]
    %v98 = vld [vmem:[#allocation5 + $0x68] sm:$0xff]
    %v99 = vld [vmem:[#allocation5 + $0x70] sm:$0xff]
    %v100 = vld [vmem:[#allocation5 + $0x78] sm:$0xff]
    %v101 = vld [vmem:[#allocation7] sm:$0x1]
    %v102 = vld [vmem:[#allocation8] sm:$0xff]
    %v103 = vld [vmem:[#allocation8 + $0x8] sm:$0xff]
    %v104 = vld [vmem:[#allocation8 + $0x10] sm:$0xff]
    %v105 = vld [vmem:[#allocation8 + $0x18] sm:$0xff]
    %v106 = vld [vmem:[#allocation10] sm:$0xf]
    %v107 = vld [vmem:[#allocation2] sm:$0x1]
    %v108 = vld [vmem:[#allocation2 + $0x8] sm:$0x1]
    %v110 = vlaneseq
    %v111 = vshrl.u32 %v110, 7
    %v112 = vsub.s32 0, %v111
    %v113 = vrot.slane %v101, %v112
    %v117 = vrot.slane %v108, 7
    %vm118 = vcmask 1041409
    %v119 = vsel %vm118, %v117, %v107
    %121 = vmatprep.subr.mxu0 0.0
    %122 = vmatpush1.msra.mxu0 %v85
    %123 = vmatprep.subr.mxu0 0.0
    %124 = vmatpush1.msra.mxu0 %v86
    %125 = vmatprep.subr.mxu0 0.0
    %126 = vmatpush1.msra.mxu0 %v87
    %127 = vmatprep.subr.mxu0 0.0
    %128 = vmatpush1.msra.mxu0 %v88
    %129 = vmatprep.subr.mxu0 0.0
    %130 = vmatpush1.msra.mxu0 %v89
    %131 = vmatprep.subr.mxu0 0.0
    %132 = vmatpush1.msra.mxu0 %v90
    %133 = vmatprep.subr.mxu0 0.0
    %134 = vmatpush1.msra.mxu0 %v91
    %135 = vmatprep.subr.mxu0 0.0
    %136 = vmatpush1.msra.mxu0 %v92
    %137 = vmatprep.subr.mxu0 0.0
    %138 = vmatpush1.msra.mxu0 %v93
    %139 = vmatprep.subr.mxu0 0.0
    %140 = vmatpush1.msra.mxu0 %v94
    %141 = vmatprep.subr.mxu0 0.0
    %142 = vmatpush1.msra.mxu0 %v95
    %143 = vmatprep.subr.mxu0 0.0
    %144 = vmatpush1.msra.mxu0 %v96
    %145 = vmatprep.subr.mxu0 0.0
    %146 = vmatpush1.msra.mxu0 %v97
    %147 = vmatprep.subr.mxu0 0.0
    %148 = vmatpush1.msra.mxu0 %v98
    %149 = vmatprep.subr.mxu0 0.0
    %150 = vmatpush1.msra.mxu0 %v99
    %151 = vmatprep.subr.mxu0 0.0
    %152 = vmatpush1.msra.mxu0 %v100
    %153 = vmatprep.subr.mxu0 0.0
    %154 = vmatpush1.msra.mxu0 0.0
    %155 = vmatprep.subr.mxu0 0.0
    %156 = vmatpush1.msra.mxu0 0.0
    %157 = vmatprep.subr.mxu0 0.0
    %158 = vmatpush1.msra.mxu0 0.0
    %159 = vmatprep.subr.mxu0 0.0
    %160 = vmatpush1.msra.mxu0 0.0
    %161 = vmatprep.subr.mxu0 0.0
    %162 = vmatpush1.msra.mxu0 0.0
    %163 = vmatprep.subr.mxu0 0.0
    %164 = vmatpush1.msra.mxu0 0.0
    %165 = vmatprep.subr.mxu0 0.0
    %166 = vmatpush1.msra.mxu0 0.0
    %167 = vmatprep.subr.mxu0 0.0
    %168 = vmatpush1.msra.mxu0 0.0
    %169 = vmatprep.subr.mxu0 0.0
    %170 = vmatpush1.msra.mxu0 0.0
    %171 = vmatprep.subr.mxu0 0.0
    %172 = vmatpush1.msra.mxu0 0.0
    %173 = vmatprep.subr.mxu0 0.0
    %174 = vmatpush1.msra.mxu0 0.0
    %175 = vmatprep.subr.mxu0 0.0
    %176 = vmatpush1.msra.mxu0 0.0
    %177 = vmatprep.subr.mxu0 0.0
    %178 = vmatpush1.msra.mxu0 0.0
    %179 = vmatprep.subr.mxu0 0.0
    %180 = vmatpush1.msra.mxu0 0.0
    %181 = vmatprep.subr.mxu0 0.0
    %182 = vmatpush1.msra.mxu0 0.0
    %183 = vmatprep.subr.mxu0 0.0
    %184 = vmatpush1.msra.mxu0 0.0
    %185 = vmatprep.mubr.f32.mxu0 0.0
    %186 = vmatmul.mubr.f32.gmra.mrb[0].mxu0 %v119
    %v187 = vpop.f32.mrb[0].mxu0
    %v188 = vadd.f32 %v113, %v187
    %v189 = vpop.f32.mrb[0].mxu0
    %190 = vdwg.mxu0
    %v191 = vtanh.pop %v188
    %vm192 = vcmask 261120
    %v194 = vsel %vm192, %v191, 0
    %196 = vmatprep.subr.mxu0 0.0
    %197 = vmatpush1.msra.mxu0 %v102
    %198 = vmatprep.subr.mxu0 0.0
    %199 = vmatpush1.msra.mxu0 %v103
    %200 = vmatprep.subr.mxu0 0.0
    %201 = vmatpush1.msra.mxu0 %v104
    %202 = vmatprep.subr.mxu0 0.0
    %203 = vmatpush1.msra.mxu0 %v105
    %204 = vmatprep.subr.mxu0 0.0
    %205 = vmatpush1.msra.mxu0 0.0
    %206 = vmatprep.subr.mxu0 0.0
    %207 = vmatpush1.msra.mxu0 0.0
    %208 = vmatprep.subr.mxu0 0.0
    %209 = vmatpush1.msra.mxu0 0.0
    %210 = vmatprep.subr.mxu0 0.0
    %211 = vmatpush1.msra.mxu0 0.0
    %212 = vmatprep.subr.mxu0 0.0
    %213 = vmatpush1.msra.mxu0 0.0
    %214 = vmatprep.subr.mxu0 0.0
    %215 = vmatpush1.msra.mxu0 0.0
    %216 = vmatprep.subr.mxu0 0.0
    %217 = vmatpush1.msra.mxu0 0.0
    %218 = vmatprep.subr.mxu0 0.0
    %219 = vmatpush1.msra.mxu0 0.0
    %220 = vmatprep.subr.mxu0 0.0
    %221 = vmatpush1.msra.mxu0 0.0
    %222 = vmatprep.subr.mxu0 0.0
    %223 = vmatpush1.msra.mxu0 0.0
    %224 = vmatprep.subr.mxu0 0.0
    %225 = vmatpush1.msra.mxu0 0.0
    %226 = vmatprep.subr.mxu0 0.0
    %227 = vmatpush1.msra.mxu0 0.0
    %228 = vmatprep.subr.mxu0 0.0
    %229 = vmatpush1.msra.mxu0 0.0
    %230 = vmatprep.subr.mxu0 0.0
    %231 = vmatpush1.msra.mxu0 0.0
    %232 = vmatprep.subr.mxu0 0.0
    %233 = vmatpush1.msra.mxu0 0.0
    %234 = vmatprep.subr.mxu0 0.0
    %235 = vmatpush1.msra.mxu0 0.0
    %236 = vmatprep.subr.mxu0 0.0
    %237 = vmatpush1.msra.mxu0 0.0
    %238 = vmatprep.subr.mxu0 0.0
    %239 = vmatpush1.msra.mxu0 0.0
    %240 = vmatprep.subr.mxu0 0.0
    %241 = vmatpush1.msra.mxu0 0.0
    %242 = vmatprep.subr.mxu0 0.0
    %243 = vmatpush1.msra.mxu0 0.0
    %244 = vmatprep.subr.mxu0 0.0
    %245 = vmatpush1.msra.mxu0 0.0
    %246 = vmatprep.subr.mxu0 0.0
    %247 = vmatpush1.msra.mxu0 0.0
    %248 = vmatprep.subr.mxu0 0.0
    %249 = vmatpush1.msra.mxu0 0.0
    %250 = vmatprep.subr.mxu0 0.0
    %251 = vmatpush1.msra.mxu0 0.0
    %252 = vmatprep.subr.mxu0 0.0
    %253 = vmatpush1.msra.mxu0 0.0
    %254 = vmatprep.subr.mxu0 0.0
    %255 = vmatpush1.msra.mxu0 0.0
    %256 = vmatprep.subr.mxu0 0.0
    %257 = vmatpush1.msra.mxu0 0.0
    %258 = vmatprep.subr.mxu0 0.0
    %259 = vmatpush1.msra.mxu0 0.0
    %260 = vmatprep.mubr.f32.mxu0 0.0
    %261 = vmatmul.mubr.f32.gmra.mrb[0].mxu0 %v194
    %v262 = vpop.f32.mrb[0].mxu0
    %v263 = vadd.f32 0.0, %v262
    %v264 = vpop.f32.mrb[0].mxu0
    %265 = vdwg.mxu0
    %v266 = vld [vmem:[#allocation2 + $0x1] sm:$0x1]
    %v267 = vld [vmem:[#allocation2 + $0x9] sm:$0x1]
    %v270 = vrot.slane %v267, 7
    %v271 = vsel %vm118, %v270, %v266
    %273 = vmatprep.subr.mxu0 0.0
    %274 = vmatpush1.msra.mxu0 %v85
    %275 = vmatprep.subr.mxu0 0.0
    %276 = vmatpush1.msra.mxu0 %v86
    %277 = vmatprep.subr.mxu0 0.0
    %278 = vmatpush1.msra.mxu0 %v87
    %279 = vmatprep.subr.mxu0 0.0
    %280 = vmatpush1.msra.mxu0 %v88
    %281 = vmatprep.subr.mxu0 0.0
    %282 = vmatpush1.msra.mxu0 %v89
    %283 = vmatprep.subr.mxu0 0.0
    %284 = vmatpush1.msra.mxu0 %v90
    %285 = vmatprep.subr.mxu0 0.0
    %286 = vmatpush1.msra.mxu0 %v91
    %287 = vmatprep.subr.mxu0 0.0
    %288 = vmatpush1.msra.mxu0 %v92
    %289 = vmatprep.subr.mxu0 0.0
    %290 = vmatpush1.msra.mxu0 %v93
    %291 = vmatprep.subr.mxu0 0.0
    %292 = vmatpush1.msra.mxu0 %v94
    %293 = vmatprep.subr.mxu0 0.0
    %294 = vmatpush1.msra.mxu0 %v95
    %295 = vmatprep.subr.mxu0 0.0
    %296 = vmatpush1.msra.mxu0 %v96
    %297 = vmatprep.subr.mxu0 0.0
    %298 = vmatpush1.msra.mxu0 %v97
    %299 = vmatprep.subr.mxu0 0.0
    %300 = vmatpush1.msra.mxu0 %v98
    %301 = vmatprep.subr.mxu0 0.0
    %302 = vmatpush1.msra.mxu0 %v99
    %303 = vmatprep.subr.mxu0 0.0
    %304 = vmatpush1.msra.mxu0 %v100
    %305 = vmatprep.subr.mxu0 0.0
    %306 = vmatpush1.msra.mxu0 0.0
    %307 = vmatprep.subr.mxu0 0.0
    %308 = vmatpush1.msra.mxu0 0.0
    %309 = vmatprep.subr.mxu0 0.0
    %310 = vmatpush1.msra.mxu0 0.0
    %311 = vmatprep.subr.mxu0 0.0
    %312 = vmatpush1.msra.mxu0 0.0
    %313 = vmatprep.subr.mxu0 0.0
    %314 = vmatpush1.msra.mxu0 0.0
    %315 = vmatprep.subr.mxu0 0.0
    %316 = vmatpush1.msra.mxu0 0.0
    %317 = vmatprep.subr.mxu0 0.0
    %318 = vmatpush1.msra.mxu0 0.0
    %319 = vmatprep.subr.mxu0 0.0
    %320 = vmatpush1.msra.mxu0 0.0
    %321 = vmatprep.subr.mxu0 0.0
    %322 = vmatpush1.msra.mxu0 0.0
    %323 = vmatprep.subr.mxu0 0.0
    %324 = vmatpush1.msra.mxu0 0.0
    %325 = vmatprep.subr.mxu0 0.0
    %326 = vmatpush1.msra.mxu0 0.0
    %327 = vmatprep.subr.mxu0 0.0
    %328 = vmatpush1.msra.mxu0 0.0
    %329 = vmatprep.subr.mxu0 0.0
    %330 = vmatpush1.msra.mxu0 0.0
    %331 = vmatprep.subr.mxu0 0.0
    %332 = vmatpush1.msra.mxu0 0.0
    %333 = vmatprep.subr.mxu0 0.0
    %334 = vmatpush1.msra.mxu0 0.0
    %335 = vmatprep.subr.mxu0 0.0
    %336 = vmatpush1.msra.mxu0 0.0
    %337 = vmatprep.mubr.f32.mxu0 0.0
    %338 = vmatmul.mubr.f32.gmra.mrb[0].mxu0 %v271
    %v339 = vpop.f32.mrb[0].mxu0
    %v340 = vadd.f32 %v113, %v339
    %v341 = vpop.f32.mrb[0].mxu0
    %342 = vdwg.mxu0
    %v343 = vtanh.pop %v340
    %v345 = vsel %vm192, %v343, 0
    %347 = vmatprep.subr.mxu0 0.0
    %348 = vmatpush1.msra.mxu0 %v102
    %349 = vmatprep.subr.mxu0 0.0
    %350 = vmatpush1.msra.mxu0 %v103
    %351 = vmatprep.subr.mxu0 0.0
    %352 = vmatpush1.msra.mxu0 %v104
    %353 = vmatprep.subr.mxu0 0.0
    %354 = vmatpush1.msra.mxu0 %v105
    %355 = vmatprep.subr.mxu0 0.0
    %356 = vmatpush1.msra.mxu0 0.0
    %357 = vmatprep.subr.mxu0 0.0
    %358 = vmatpush1.msra.mxu0 0.0
    %359 = vmatprep.subr.mxu0 0.0
    %360 = vmatpush1.msra.mxu0 0.0
    %361 = vmatprep.subr.mxu0 0.0
    %362 = vmatpush1.msra.mxu0 0.0
    %363 = vmatprep.subr.mxu0 0.0
    %364 = vmatpush1.msra.mxu0 0.0
    %365 = vmatprep.subr.mxu0 0.0
    %366 = vmatpush1.msra.mxu0 0.0
    %367 = vmatprep.subr.mxu0 0.0
    %368 = vmatpush1.msra.mxu0 0.0
    %369 = vmatprep.subr.mxu0 0.0
    %370 = vmatpush1.msra.mxu0 0.0
    %371 = vmatprep.subr.mxu0 0.0
    %372 = vmatpush1.msra.mxu0 0.0
    %373 = vmatprep.subr.mxu0 0.0
    %374 = vmatpush1.msra.mxu0 0.0
    %375 = vmatprep.subr.mxu0 0.0
    %376 = vmatpush1.msra.mxu0 0.0
    %377 = vmatprep.subr.mxu0 0.0
    %378 = vmatpush1.msra.mxu0 0.0
    %379 = vmatprep.subr.mxu0 0.0
    %380 = vmatpush1.msra.mxu0 0.0
    %381 = vmatprep.subr.mxu0 0.0
    %382 = vmatpush1.msra.mxu0 0.0
    %383 = vmatprep.subr.mxu0 0.0
    %384 = vmatpush1.msra.mxu0 0.0
    %385 = vmatprep.subr.mxu0 0.0
    %386 = vmatpush1.msra.mxu0 0.0
    %387 = vmatprep.subr.mxu0 0.0
    %388 = vmatpush1.msra.mxu0 0.0
    %389 = vmatprep.subr.mxu0 0.0
    %390 = vmatpush1.msra.mxu0 0.0
    %391 = vmatprep.subr.mxu0 0.0
    %392 = vmatpush1.msra.mxu0 0.0
    %393 = vmatprep.subr.mxu0 0.0
    %394 = vmatpush1.msra.mxu0 0.0
    %395 = vmatprep.subr.mxu0 0.0
    %396 = vmatpush1.msra.mxu0 0.0
    %397 = vmatprep.subr.mxu0 0.0
    %398 = vmatpush1.msra.mxu0 0.0
    %399 = vmatprep.subr.mxu0 0.0
    %400 = vmatpush1.msra.mxu0 0.0
    %401 = vmatprep.subr.mxu0 0.0
    %402 = vmatpush1.msra.mxu0 0.0
    %403 = vmatprep.subr.mxu0 0.0
    %404 = vmatpush1.msra.mxu0 0.0
    %405 = vmatprep.subr.mxu0 0.0
    %406 = vmatpush1.msra.mxu0 0.0
    %407 = vmatprep.subr.mxu0 0.0
    %408 = vmatpush1.msra.mxu0 0.0
    %409 = vmatprep.subr.mxu0 0.0
    %410 = vmatpush1.msra.mxu0 0.0
    %411 = vmatprep.mubr.f32.mxu0 0.0
    %412 = vmatmul.mubr.f32.gmra.mrb[0].mxu0 %v345
    %v413 = vpop.f32.mrb[0].mxu0
    %v414 = vadd.f32 0.0, %v413
    %v415 = vpop.f32.mrb[0].mxu0
    %416 = vdwg.mxu0
    %v417 = vld [vmem:[#allocation2 + $0x2] sm:$0x1]
    %v418 = vld [vmem:[#allocation2 + $0xa] sm:$0x1]
    %v421 = vrot.slane %v418, 7
    %v422 = vsel %vm118, %v421, %v417
    %424 = vmatprep.subr.mxu0 0.0
    %425 = vmatpush1.msra.mxu0 %v85
    %426 = vmatprep.subr.mxu0 0.0
    %427 = vmatpush1.msra.mxu0 %v86
    %428 = vmatprep.subr.mxu0 0.0
    %429 = vmatpush1.msra.mxu0 %v87
    %430 = vmatprep.subr.mxu0 0.0
    %431 = vmatpush1.msra.mxu0 %v88
    %432 = vmatprep.subr.mxu0 0.0
    %433 = vmatpush1.msra.mxu0 %v89
    %434 = vmatprep.subr.mxu0 0.0
    %435 = vmatpush1.msra.mxu0 %v90
    %436 = vmatprep.subr.mxu0 0.0
    %437 = vmatpush1.msra.mxu0 %v91
    %438 = vmatprep.subr.mxu0 0.0
    %439 = vmatpush1.msra.mxu0 %v92
    %440 = vmatprep.subr.mxu0 0.0
    %441 = vmatpush1.msra.mxu0 %v93
    %442 = vmatprep.subr.mxu0 0.0
    %443 = vmatpush1.msra.mxu0 %v94
    %444 = vmatprep.subr.mxu0 0.0
    %445 = vmatpush1.msra.mxu0 %v95
    %446 = vmatprep.subr.mxu0 0.0
    %447 = vmatpush1.msra.mxu0 %v96
    %448 = vmatprep.subr.mxu0 0.0
    %449 = vmatpush1.msra.mxu0 %v97
    %450 = vmatprep.subr.mxu0 0.0
    %451 = vmatpush1.msra.mxu0 %v98
    %452 = vmatprep.subr.mxu0 0.0
    %453 = vmatpush1.msra.mxu0 %v99
    %454 = vmatprep.subr.mxu0 0.0
    %455 = vmatpush1.msra.mxu0 %v100
    %456 = vmatprep.subr.mxu0 0.0
    %457 = vmatpush1.msra.mxu0 0.0
    %458 = vmatprep.subr.mxu0 0.0
    %459 = vmatpush1.msra.mxu0 0.0
    %460 = vmatprep.subr.mxu0 0.0
    %461 = vmatpush1.msra.mxu0 0.0
    %462 = vmatprep.subr.mxu0 0.0
    %463 = vmatpush1.msra.mxu0 0.0
    %464 = vmatprep.subr.mxu0 0.0
    %465 = vmatpush1.msra.mxu0 0.0
    %466 = vmatprep.subr.mxu0 0.0
    %467 = vmatpush1.msra.mxu0 0.0
    %468 = vmatprep.subr.mxu0 0.0
    %469 = vmatpush1.msra.mxu0 0.0
    %470 = vmatprep.subr.mxu0 0.0
    %471 = vmatpush1.msra.mxu0 0.0
    %472 = vmatprep.subr.mxu0 0.0
    %473 = vmatpush1.msra.mxu0 0.0
    %474 = vmatprep.subr.mxu0 0.0
    %475 = vmatpush1.msra.mxu0 0.0
    %476 = vmatprep.subr.mxu0 0.0
    %477 = vmatpush1.msra.mxu0 0.0
    %478 = vmatprep.subr.mxu0 0.0
    %479 = vmatpush1.msra.mxu0 0.0
    %480 = vmatprep.subr.mxu0 0.0
    %481 = vmatpush1.msra.mxu0 0.0
    %482 = vmatprep.subr.mxu0 0.0
    %483 = vmatpush1.msra.mxu0 0.0
    %484 = vmatprep.subr.mxu0 0.0
    %485 = vmatpush1.msra.mxu0 0.0
    %486 = vmatprep.subr.mxu0 0.0
    %487 = vmatpush1.msra.mxu0 0.0
    %488 = vmatprep.mubr.f32.mxu0 0.0
    %489 = vmatmul.mubr.f32.gmra.mrb[0].mxu0 %v422
    %v490 = vpop.f32.mrb[0].mxu0
    %v491 = vadd.f32 %v113, %v490
    %v492 = vpop.f32.mrb[0].mxu0
    %493 = vdwg.mxu0
    %v494 = vtanh.pop %v491
    %v496 = vsel %vm192, %v494, 0
    %498 = vmatprep.subr.mxu0 0.0
    %499 = vmatpush1.msra.mxu0 %v102
    %500 = vmatprep.subr.mxu0 0.0
    %501 = vmatpush1.msra.mxu0 %v103
    %502 = vmatprep.subr.mxu0 0.0
    %503 = vmatpush1.msra.mxu0 %v104
    %504 = vmatprep.subr.mxu0 0.0
    %505 = vmatpush1.msra.mxu0 %v105
    %506 = vmatprep.subr.mxu0 0.0
    %507 = vmatpush1.msra.mxu0 0.0
    %508 = vmatprep.subr.mxu0 0.0
    %509 = vmatpush1.msra.mxu0 0.0
    %510 = vmatprep.subr.mxu0 0.0
    %511 = vmatpush1.msra.mxu0 0.0
    %512 = vmatprep.subr.mxu0 0.0
    %513 = vmatpush1.msra.mxu0 0.0
    %514 = vmatprep.subr.mxu0 0.0
    %515 = vmatpush1.msra.mxu0 0.0
    %516 = vmatprep.subr.mxu0 0.0
    %517 = vmatpush1.msra.mxu0 0.0
    %518 = vmatprep.subr.mxu0 0.0
    %519 = vmatpush1.msra.mxu0 0.0
    %520 = vmatprep.subr.mxu0 0.0
    %521 = vmatpush1.msra.mxu0 0.0
    %522 = vmatprep.subr.mxu0 0.0
    %523 = vmatpush1.msra.mxu0 0.0
    %524 = vmatprep.subr.mxu0 0.0
    %525 = vmatpush1.msra.mxu0 0.0
    %526 = vmatprep.subr.mxu0 0.0
    %527 = vmatpush1.msra.mxu0 0.0
    %528 = vmatprep.subr.mxu0 0.0
    %529 = vmatpush1.msra.mxu0 0.0
    %530 = vmatprep.subr.mxu0 0.0
    %531 = vmatpush1.msra.mxu0 0.0
    %532 = vmatprep.subr.mxu0 0.0
    %533 = vmatpush1.msra.mxu0 0.0
    %534 = vmatprep.subr.mxu0 0.0
    %535 = vmatpush1.msra.mxu0 0.0
    %536 = vmatprep.subr.mxu0 0.0
    %537 = vmatpush1.msra.mxu0 0.0
    %538 = vmatprep.subr.mxu0 0.0
    %539 = vmatpush1.msra.mxu0 0.0
    %540 = vmatprep.subr.mxu0 0.0
    %541 = vmatpush1.msra.mxu0 0.0
    %542 = vmatprep.subr.mxu0 0.0
    %543 = vmatpush1.msra.mxu0 0.0
    %544 = vmatprep.subr.mxu0 0.0
    %545 = vmatpush1.msra.mxu0 0.0
    %546 = vmatprep.subr.mxu0 0.0
    %547 = vmatpush1.msra.mxu0 0.0
    %548 = vmatprep.subr.mxu0 0.0
    %549 = vmatpush1.msra.mxu0 0.0
    %550 = vmatprep.subr.mxu0 0.0
    %551 = vmatpush1.msra.mxu0 0.0
    %552 = vmatprep.subr.mxu0 0.0
    %553 = vmatpush1.msra.mxu0 0.0
    %554 = vmatprep.subr.mxu0 0.0
    %555 = vmatpush1.msra.mxu0 0.0
    %556 = vmatprep.subr.mxu0 0.0
    %557 = vmatpush1.msra.mxu0 0.0
    %558 = vmatprep.subr.mxu0 0.0
    %559 = vmatpush1.msra.mxu0 0.0
    %560 = vmatprep.subr.mxu0 0.0
    %561 = vmatpush1.msra.mxu0 0.0
    %562 = vmatprep.mubr.f32.mxu0 0.0
    %563 = vmatmul.mubr.f32.gmra.mrb[0].mxu0 %v496
    %v564 = vpop.f32.mrb[0].mxu0
    %v565 = vadd.f32 0.0, %v564
    %v566 = vpop.f32.mrb[0].mxu0
    %567 = vdwg.mxu0
    %v568 = vld [vmem:[#allocation2 + $0x3] sm:$0x1]
    %v569 = vld [vmem:[#allocation2 + $0xb] sm:$0x1]
    %v572 = vrot.slane %v569, 7
    %v573 = vsel %vm118, %v572, %v568
    %575 = vmatprep.subr.mxu0 0.0
    %576 = vmatpush1.msra.mxu0 %v85
    %577 = vmatprep.subr.mxu0 0.0
    %578 = vmatpush1.msra.mxu0 %v86
    %579 = vmatprep.subr.mxu0 0.0
    %580 = vmatpush1.msra.mxu0 %v87
    %581 = vmatprep.subr.mxu0 0.0
    %582 = vmatpush1.msra.mxu0 %v88
    %583 = vmatprep.subr.mxu0 0.0
    %584 = vmatpush1.msra.mxu0 %v89
    %585 = vmatprep.subr.mxu0 0.0
    %586 = vmatpush1.msra.mxu0 %v90
    %587 = vmatprep.subr.mxu0 0.0
    %588 = vmatpush1.msra.mxu0 %v91
    %589 = vmatprep.subr.mxu0 0.0
    %590 = vmatpush1.msra.mxu0 %v92
    %591 = vmatprep.subr.mxu0 0.0
    %592 = vmatpush1.msra.mxu0 %v93
    %593 = vmatprep.subr.mxu0 0.0
    %594 = vmatpush1.msra.mxu0 %v94
    %595 = vmatprep.subr.mxu0 0.0
    %596 = vmatpush1.msra.mxu0 %v95
    %597 = vmatprep.subr.mxu0 0.0
    %598 = vmatpush1.msra.mxu0 %v96
    %599 = vmatprep.subr.mxu0 0.0
    %600 = vmatpush1.msra.mxu0 %v97
    %601 = vmatprep.subr.mxu0 0.0
    %602 = vmatpush1.msra.mxu0 %v98
    %603 = vmatprep.subr.mxu0 0.0
    %604 = vmatpush1.msra.mxu0 %v99
    %605 = vmatprep.subr.mxu0 0.0
    %606 = vmatpush1.msra.mxu0 %v100
    %607 = vmatprep.subr.mxu0 0.0
    %608 = vmatpush1.msra.mxu0 0.0
    %609 = vmatprep.subr.mxu0 0.0
    %610 = vmatpush1.msra.mxu0 0.0
    %611 = vmatprep.subr.mxu0 0.0
    %612 = vmatpush1.msra.mxu0 0.0
    %613 = vmatprep.subr.mxu0 0.0
    %614 = vmatpush1.msra.mxu0 0.0
    %615 = vmatprep.subr.mxu0 0.0
    %616 = vmatpush1.msra.mxu0 0.0
    %617 = vmatprep.subr.mxu0 0.0
    %618 = vmatpush1.msra.mxu0 0.0
    %619 = vmatprep.subr.mxu0 0.0
    %620 = vmatpush1.msra.mxu0 0.0
    %621 = vmatprep.subr.mxu0 0.0
    %622 = vmatpush1.msra.mxu0 0.0
    %623 = vmatprep.subr.mxu0 0.0
    %624 = vmatpush1.msra.mxu0 0.0
    %625 = vmatprep.subr.mxu0 0.0
    %626 = vmatpush1.msra.mxu0 0.0
    %627 = vmatprep.subr.mxu0 0.0
    %628 = vmatpush1.msra.mxu0 0.0
    %629 = vmatprep.subr.mxu0 0.0
    %630 = vmatpush1.msra.mxu0 0.0
    %631 = vmatprep.subr.mxu0 0.0
    %632 = vmatpush1.msra.mxu0 0.0
    %633 = vmatprep.subr.mxu0 0.0
    %634 = vmatpush1.msra.mxu0 0.0
    %635 = vmatprep.subr.mxu0 0.0
    %636 = vmatpush1.msra.mxu0 0.0
    %637 = vmatprep.subr.mxu0 0.0
    %638 = vmatpush1.msra.mxu0 0.0
    %639 = vmatprep.mubr.f32.mxu0 0.0
    %640 = vmatmul.mubr.f32.gmra.mrb[0].mxu0 %v573
    %v641 = vpop.f32.mrb[0].mxu0
    %v642 = vadd.f32 %v113, %v641
    %v643 = vpop.f32.mrb[0].mxu0
    %644 = vdwg.mxu0
    %v645 = vtanh.pop %v642
    %v647 = vsel %vm192, %v645, 0
    %649 = vmatprep.subr.mxu0 0.0
    %650 = vmatpush1.msra.mxu0 %v102
    %651 = vmatprep.subr.mxu0 0.0
    %652 = vmatpush1.msra.mxu0 %v103
    %653 = vmatprep.subr.mxu0 0.0
    %654 = vmatpush1.msra.mxu0 %v104
    %655 = vmatprep.subr.mxu0 0.0
    %656 = vmatpush1.msra.mxu0 %v105
    %657 = vmatprep.subr.mxu0 0.0
    %658 = vmatpush1.msra.mxu0 0.0
    %659 = vmatprep.subr.mxu0 0.0
    %660 = vmatpush1.msra.mxu0 0.0
    %661 = vmatprep.subr.mxu0 0.0
    %662 = vmatpush1.msra.mxu0 0.0
    %663 = vmatprep.subr.mxu0 0.0
    %664 = vmatpush1.msra.mxu0 0.0
    %665 = vmatprep.subr.mxu0 0.0
    %666 = vmatpush1.msra.mxu0 0.0
    %667 = vmatprep.subr.mxu0 0.0
    %668 = vmatpush1.msra.mxu0 0.0
    %669 = vmatprep.subr.mxu0 0.0
    %670 = vmatpush1.msra.mxu0 0.0
    %671 = vmatprep.subr.mxu0 0.0
    %672 = vmatpush1.msra.mxu0 0.0
    %673 = vmatprep.subr.mxu0 0.0
    %674 = vmatpush1.msra.mxu0 0.0
    %675 = vmatprep.subr.mxu0 0.0
    %676 = vmatpush1.msra.mxu0 0.0
    %677 = vmatprep.subr.mxu0 0.0
    %678 = vmatpush1.msra.mxu0 0.0
    %679 = vmatprep.subr.mxu0 0.0
    %680 = vmatpush1.msra.mxu0 0.0
    %681 = vmatprep.subr.mxu0 0.0
    %682 = vmatpush1.msra.mxu0 0.0
    %683 = vmatprep.subr.mxu0 0.0
    %684 = vmatpush1.msra.mxu0 0.0
    %685 = vmatprep.subr.mxu0 0.0
    %686 = vmatpush1.msra.mxu0 0.0
    %687 = vmatprep.subr.mxu0 0.0
    %688 = vmatpush1.msra.mxu0 0.0
    %689 = vmatprep.subr.mxu0 0.0
    %690 = vmatpush1.msra.mxu0 0.0
    %691 = vmatprep.subr.mxu0 0.0
    %692 = vmatpush1.msra.mxu0 0.0
    %693 = vmatprep.subr.mxu0 0.0
    %694 = vmatpush1.msra.mxu0 0.0
    %695 = vmatprep.subr.mxu0 0.0
    %696 = vmatpush1.msra.mxu0 0.0
    %697 = vmatprep.subr.mxu0 0.0
    %698 = vmatpush1.msra.mxu0 0.0
    %699 = vmatprep.subr.mxu0 0.0
    %700 = vmatpush1.msra.mxu0 0.0
    %701 = vmatprep.subr.mxu0 0.0
    %702 = vmatpush1.msra.mxu0 0.0
    %703 = vmatprep.subr.mxu0 0.0
    %704 = vmatpush1.msra.mxu0 0.0
    %705 = vmatprep.subr.mxu0 0.0
    %706 = vmatpush1.msra.mxu0 0.0
    %707 = vmatprep.subr.mxu0 0.0
    %708 = vmatpush1.msra.mxu0 0.0
    %709 = vmatprep.subr.mxu0 0.0
    %710 = vmatpush1.msra.mxu0 0.0
    %711 = vmatprep.subr.mxu0 0.0
    %712 = vmatpush1.msra.mxu0 0.0
    %713 = vmatprep.mubr.f32.mxu0 0.0
    %714 = vmatmul.mubr.f32.gmra.mrb[0].mxu0 %v647
    %v715 = vpop.f32.mrb[0].mxu0
    %v716 = vadd.f32 0.0, %v715
    %v717 = vpop.f32.mrb[0].mxu0
    %718 = vdwg.mxu0
    %v719 = vld [vmem:[#allocation2 + $0x4] sm:$0x1]
    %v720 = vld [vmem:[#allocation2 + $0xc] sm:$0x1]
    %v723 = vrot.slane %v720, 7
    %v724 = vsel %vm118, %v723, %v719
    %726 = vmatprep.subr.mxu0 0.0
    %727 = vmatpush1.msra.mxu0 %v85
    %728 = vmatprep.subr.mxu0 0.0
    %729 = vmatpush1.msra.mxu0 %v86
    %730 = vmatprep.subr.mxu0 0.0
    %731 = vmatpush1.msra.mxu0 %v87
    %732 = vmatprep.subr.mxu0 0.0
    %733 = vmatpush1.msra.mxu0 %v88
    %734 = vmatprep.subr.mxu0 0.0
    %735 = vmatpush1.msra.mxu0 %v89
    %736 = vmatprep.subr.mxu0 0.0
    %737 = vmatpush1.msra.mxu0 %v90
    %738 = vmatprep.subr.mxu0 0.0
    %739 = vmatpush1.msra.mxu0 %v91
    %740 = vmatprep.subr.mxu0 0.0
    %741 = vmatpush1.msra.mxu0 %v92
    %742 = vmatprep.subr.mxu0 0.0
    %743 = vmatpush1.msra.mxu0 %v93
    %744 = vmatprep.subr.mxu0 0.0
    %745 = vmatpush1.msra.mxu0 %v94
    %746 = vmatprep.subr.mxu0 0.0
    %747 = vmatpush1.msra.mxu0 %v95
    %748 = vmatprep.subr.mxu0 0.0
    %749 = vmatpush1.msra.mxu0 %v96
    %750 = vmatprep.subr.mxu0 0.0
    %751 = vmatpush1.msra.mxu0 %v97
    %752 = vmatprep.subr.mxu0 0.0
    %753 = vmatpush1.msra.mxu0 %v98
    %754 = vmatprep.subr.mxu0 0.0
    %755 = vmatpush1.msra.mxu0 %v99
    %756 = vmatprep.subr.mxu0 0.0
    %757 = vmatpush1.msra.mxu0 %v100
    %758 = vmatprep.subr.mxu0 0.0
    %759 = vmatpush1.msra.mxu0 0.0
    %760 = vmatprep.subr.mxu0 0.0
    %761 = vmatpush1.msra.mxu0 0.0
    %762 = vmatprep.subr.mxu0 0.0
    %763 = vmatpush1.msra.mxu0 0.0
    %764 = vmatprep.subr.mxu0 0.0
    %765 = vmatpush1.msra.mxu0 0.0
    %766 = vmatprep.subr.mxu0 0.0
    %767 = vmatpush1.msra.mxu0 0.0
    %768 = vmatprep.subr.mxu0 0.0
    %769 = vmatpush1.msra.mxu0 0.0
    %770 = vmatprep.subr.mxu0 0.0
    %771 = vmatpush1.msra.mxu0 0.0
    %772 = vmatprep.subr.mxu0 0.0
    %773 = vmatpush1.msra.mxu0 0.0
    %774 = vmatprep.subr.mxu0 0.0
    %775 = vmatpush1.msra.mxu0 0.0
    %776 = vmatprep.subr.mxu0 0.0
    %777 = vmatpush1.msra.mxu0 0.0
    %778 = vmatprep.subr.mxu0 0.0
    %779 = vmatpush1.msra.mxu0 0.0
    %780 = vmatprep.subr.mxu0 0.0
    %781 = vmatpush1.msra.mxu0 0.0
    %782 = vmatprep.subr.mxu0 0.0
    %783 = vmatpush1.msra.mxu0 0.0
    %784 = vmatprep.subr.mxu0 0.0
    %785 = vmatpush1.msra.mxu0 0.0
    %786 = vmatprep.subr.mxu0 0.0
    %787 = vmatpush1.msra.mxu0 0.0
    %788 = vmatprep.subr.mxu0 0.0
    %789 = vmatpush1.msra.mxu0 0.0
    %790 = vmatprep.mubr.f32.mxu0 0.0
    %791 = vmatmul.mubr.f32.gmra.mrb[0].mxu0 %v724
    %v792 = vpop.f32.mrb[0].mxu0
    %v793 = vadd.f32 %v113, %v792
    %v794 = vpop.f32.mrb[0].mxu0
    %795 = vdwg.mxu0
    %v796 = vtanh.pop %v793
    %v798 = vsel %vm192, %v796, 0
    %800 = vmatprep.subr.mxu0 0.0
    %801 = vmatpush1.msra.mxu0 %v102
    %802 = vmatprep.subr.mxu0 0.0
    %803 = vmatpush1.msra.mxu0 %v103
    %804 = vmatprep.subr.mxu0 0.0
    %805 = vmatpush1.msra.mxu0 %v104
    %806 = vmatprep.subr.mxu0 0.0
    %807 = vmatpush1.msra.mxu0 %v105
    %808 = vmatprep.subr.mxu0 0.0
    %809 = vmatpush1.msra.mxu0 0.0
    %810 = vmatprep.subr.mxu0 0.0
    %811 = vmatpush1.msra.mxu0 0.0
    %812 = vmatprep.subr.mxu0 0.0
    %813 = vmatpush1.msra.mxu0 0.0
    %814 = vmatprep.subr.mxu0 0.0
    %815 = vmatpush1.msra.mxu0 0.0
    %816 = vmatprep.subr.mxu0 0.0
    %817 = vmatpush1.msra.mxu0 0.0
    %818 = vmatprep.subr.mxu0 0.0
    %819 = vmatpush1.msra.mxu0 0.0
    %820 = vmatprep.subr.mxu0 0.0
    %821 = vmatpush1.msra.mxu0 0.0
    %822 = vmatprep.subr.mxu0 0.0
    %823 = vmatpush1.msra.mxu0 0.0
    %824 = vmatprep.subr.mxu0 0.0
    %825 = vmatpush1.msra.mxu0 0.0
    %826 = vmatprep.subr.mxu0 0.0
    %827 = vmatpush1.msra.mxu0 0.0
    %828 = vmatprep.subr.mxu0 0.0
    %829 = vmatpush1.msra.mxu0 0.0
    %830 = vmatprep.subr.mxu0 0.0
    %831 = vmatpush1.msra.mxu0 0.0
    %832 = vmatprep.subr.mxu0 0.0
    %833 = vmatpush1.msra.mxu0 0.0
    %834 = vmatprep.subr.mxu0 0.0
    %835 = vmatpush1.msra.mxu0 0.0
    %836 = vmatprep.subr.mxu0 0.0
    %837 = vmatpush1.msra.mxu0 0.0
    %838 = vmatprep.subr.mxu0 0.0
    %839 = vmatpush1.msra.mxu0 0.0
    %840 = vmatprep.subr.mxu0 0.0
    %841 = vmatpush1.msra.mxu0 0.0
    %842 = vmatprep.subr.mxu0 0.0
    %843 = vmatpush1.msra.mxu0 0.0
    %844 = vmatprep.subr.mxu0 0.0
    %845 = vmatpush1.msra.mxu0 0.0
    %846 = vmatprep.subr.mxu0 0.0
    %847 = vmatpush1.msra.mxu0 0.0
    %848 = vmatprep.subr.mxu0 0.0
    %849 = vmatpush1.msra.mxu0 0.0
    %850 = vmatprep.subr.mxu0 0.0
    %851 = vmatpush1.msra.mxu0 0.0
    %852 = vmatprep.subr.mxu0 0.0
    %853 = vmatpush1.msra.mxu0 0.0
    %854 = vmatprep.subr.mxu0 0.0
    %855 = vmatpush1.msra.mxu0 0.0
    %856 = vmatprep.subr.mxu0 0.0
    %857 = vmatpush1.msra.mxu0 0.0
    %858 = vmatprep.subr.mxu0 0.0
    %859 = vmatpush1.msra.mxu0 0.0
    %860 = vmatprep.subr.mxu0 0.0
    %861 = vmatpush1.msra.mxu0 0.0
    %862 = vmatprep.subr.mxu0 0.0
    %863 = vmatpush1.msra.mxu0 0.0
    %864 = vmatprep.mubr.f32.mxu0 0.0
    %865 = vmatmul.mubr.f32.gmra.mrb[0].mxu0 %v798
    %v866 = vpop.f32.mrb[0].mxu0
    %v867 = vadd.f32 0.0, %v866
    %v868 = vpop.f32.mrb[0].mxu0
    %869 = vdwg.mxu0
    %v870 = vld [vmem:[#allocation2 + $0x5] sm:$0x1]
    %v871 = vld [vmem:[#allocation2 + $0xd] sm:$0x1]
    %v874 = vrot.slane %v871, 7
    %v875 = vsel %vm118, %v874, %v870
    %877 = vmatprep.subr.mxu0 0.0
    %878 = vmatpush1.msra.mxu0 %v85
    %879 = vmatprep.subr.mxu0 0.0
    %880 = vmatpush1.msra.mxu0 %v86
    %881 = vmatprep.subr.mxu0 0.0
    %882 = vmatpush1.msra.mxu0 %v87
    %883 = vmatprep.subr.mxu0 0.0
    %884 = vmatpush1.msra.mxu0 %v88
    %885 = vmatprep.subr.mxu0 0.0
    %886 = vmatpush1.msra.mxu0 %v89
    %887 = vmatprep.subr.mxu0 0.0
    %888 = vmatpush1.msra.mxu0 %v90
    %889 = vmatprep.subr.mxu0 0.0
    %890 = vmatpush1.msra.mxu0 %v91
    %891 = vmatprep.subr.mxu0 0.0
    %892 = vmatpush1.msra.mxu0 %v92
    %893 = vmatprep.subr.mxu0 0.0
    %894 = vmatpush1.msra.mxu0 %v93
    %895 = vmatprep.subr.mxu0 0.0
    %896 = vmatpush1.msra.mxu0 %v94
    %897 = vmatprep.subr.mxu0 0.0
    %898 = vmatpush1.msra.mxu0 %v95
    %899 = vmatprep.subr.mxu0 0.0
    %900 = vmatpush1.msra.mxu0 %v96
    %901 = vmatprep.subr.mxu0 0.0
    %902 = vmatpush1.msra.mxu0 %v97
    %903 = vmatprep.subr.mxu0 0.0
    %904 = vmatpush1.msra.mxu0 %v98
    %905 = vmatprep.subr.mxu0 0.0
    %906 = vmatpush1.msra.mxu0 %v99
    %907 = vmatprep.subr.mxu0 0.0
    %908 = vmatpush1.msra.mxu0 %v100
    %909 = vmatprep.subr.mxu0 0.0
    %910 = vmatpush1.msra.mxu0 0.0
    %911 = vmatprep.subr.mxu0 0.0
    %912 = vmatpush1.msra.mxu0 0.0
    %913 = vmatprep.subr.mxu0 0.0
    %914 = vmatpush1.msra.mxu0 0.0
    %915 = vmatprep.subr.mxu0 0.0
    %916 = vmatpush1.msra.mxu0 0.0
    %917 = vmatprep.subr.mxu0 0.0
    %918 = vmatpush1.msra.mxu0 0.0
    %919 = vmatprep.subr.mxu0 0.0
    %920 = vmatpush1.msra.mxu0 0.0
    %921 = vmatprep.subr.mxu0 0.0
    %922 = vmatpush1.msra.mxu0 0.0
    %923 = vmatprep.subr.mxu0 0.0
    %924 = vmatpush1.msra.mxu0 0.0
    %925 = vmatprep.subr.mxu0 0.0
    %926 = vmatpush1.msra.mxu0 0.0
    %927 = vmatprep.subr.mxu0 0.0
    %928 = vmatpush1.msra.mxu0 0.0
    %929 = vmatprep.subr.mxu0 0.0
    %930 = vmatpush1.msra.mxu0 0.0
    %931 = vmatprep.subr.mxu0 0.0
    %932 = vmatpush1.msra.mxu0 0.0
    %933 = vmatprep.subr.mxu0 0.0
    %934 = vmatpush1.msra.mxu0 0.0
    %935 = vmatprep.subr.mxu0 0.0
    %936 = vmatpush1.msra.mxu0 0.0
    %937 = vmatprep.subr.mxu0 0.0
    %938 = vmatpush1.msra.mxu0 0.0
    %939 = vmatprep.subr.mxu0 0.0
    %940 = vmatpush1.msra.mxu0 0.0
    %941 = vmatprep.mubr.f32.mxu0 0.0
    %942 = vmatmul.mubr.f32.gmra.mrb[0].mxu0 %v875
    %v943 = vpop.f32.mrb[0].mxu0
    %v944 = vadd.f32 %v113, %v943
    %v945 = vpop.f32.mrb[0].mxu0
    %946 = vdwg.mxu0
    %v947 = vtanh.pop %v944
    %v949 = vsel %vm192, %v947, 0
    %951 = vmatprep.subr.mxu0 0.0
    %952 = vmatpush1.msra.mxu0 %v102
    %953 = vmatprep.subr.mxu0 0.0
    %954 = vmatpush1.msra.mxu0 %v103
    %955 = vmatprep.subr.mxu0 0.0
    %956 = vmatpush1.msra.mxu0 %v104
    %957 = vmatprep.subr.mxu0 0.0
    %958 = vmatpush1.msra.mxu0 %v105
    %959 = vmatprep.subr.mxu0 0.0
    %960 = vmatpush1.msra.mxu0 0.0
    %961 = vmatprep.subr.mxu0 0.0
    %962 = vmatpush1.msra.mxu0 0.0
    %963 = vmatprep.subr.mxu0 0.0
    %964 = vmatpush1.msra.mxu0 0.0
    %965 = vmatprep.subr.mxu0 0.0
    %966 = vmatpush1.msra.mxu0 0.0
    %967 = vmatprep.subr.mxu0 0.0
    %968 = vmatpush1.msra.mxu0 0.0
    %969 = vmatprep.subr.mxu0 0.0
    %970 = vmatpush1.msra.mxu0 0.0
    %971 = vmatprep.subr.mxu0 0.0
    %972 = vmatpush1.msra.mxu0 0.0
    %973 = vmatprep.subr.mxu0 0.0
    %974 = vmatpush1.msra.mxu0 0.0
    %975 = vmatprep.subr.mxu0 0.0
    %976 = vmatpush1.msra.mxu0 0.0
    %977 = vmatprep.subr.mxu0 0.0
    %978 = vmatpush1.msra.mxu0 0.0
    %979 = vmatprep.subr.mxu0 0.0
    %980 = vmatpush1.msra.mxu0 0.0
    %981 = vmatprep.subr.mxu0 0.0
    %982 = vmatpush1.msra.mxu0 0.0
    %983 = vmatprep.subr.mxu0 0.0
    %984 = vmatpush1.msra.mxu0 0.0
    %985 = vmatprep.subr.mxu0 0.0
    %986 = vmatpush1.msra.mxu0 0.0
    %987 = vmatprep.subr.mxu0 0.0
    %988 = vmatpush1.msra.mxu0 0.0
    %989 = vmatprep.subr.mxu0 0.0
    %990 = vmatpush1.msra.mxu0 0.0
    %991 = vmatprep.subr.mxu0 0.0
    %992 = vmatpush1.msra.mxu0 0.0
    %993 = vmatprep.subr.mxu0 0.0
    %994 = vmatpush1.msra.mxu0 0.0
    %995 = vmatprep.subr.mxu0 0.0
    %996 = vmatpush1.msra.mxu0 0.0
    %997 = vmatprep.subr.mxu0 0.0
    %998 = vmatpush1.msra.mxu0 0.0
    %999 = vmatprep.subr.mxu0 0.0
    %1000 = vmatpush1.msra.mxu0 0.0
    %1001 = vmatprep.subr.mxu0 0.0
    %1002 = vmatpush1.msra.mxu0 0.0
    %1003 = vmatprep.subr.mxu0 0.0
    %1004 = vmatpush1.msra.mxu0 0.0
    %1005 = vmatprep.subr.mxu0 0.0
    %1006 = vmatpush1.msra.mxu0 0.0
    %1007 = vmatprep.subr.mxu0 0.0
    %1008 = vmatpush1.msra.mxu0 0.0
    %1009 = vmatprep.subr.mxu0 0.0
    %1010 = vmatpush1.msra.mxu0 0.0
    %1011 = vmatprep.subr.mxu0 0.0
    %1012 = vmatpush1.msra.mxu0 0.0
    %1013 = vmatprep.subr.mxu0 0.0
    %1014 = vmatpush1.msra.mxu0 0.0
    %1015 = vmatprep.mubr.f32.mxu0 0.0
    %1016 = vmatmul.mubr.f32.gmra.mrb[0].mxu0 %v949
    %v1017 = vpop.f32.mrb[0].mxu0
    %v1018 = vadd.f32 0.0, %v1017
    %v1019 = vpop.f32.mrb[0].mxu0
    %1020 = vdwg.mxu0
    %v1021 = vld [vmem:[#allocation2 + $0x6] sm:$0x1]
    %v1022 = vld [vmem:[#allocation2 + $0xe] sm:$0x1]
    %v1025 = vrot.slane %v1022, 7
    %v1026 = vsel %vm118, %v1025, %v1021
    %1028 = vmatprep.subr.mxu0 0.0
    %1029 = vmatpush1.msra.mxu0 %v85
    %1030 = vmatprep.subr.mxu0 0.0
    %1031 = vmatpush1.msra.mxu0 %v86
    %1032 = vmatprep.subr.mxu0 0.0
    %1033 = vmatpush1.msra.mxu0 %v87
    %1034 = vmatprep.subr.mxu0 0.0
    %1035 = vmatpush1.msra.mxu0 %v88
    %1036 = vmatprep.subr.mxu0 0.0
    %1037 = vmatpush1.msra.mxu0 %v89
    %1038 = vmatprep.subr.mxu0 0.0
    %1039 = vmatpush1.msra.mxu0 %v90
    %1040 = vmatprep.subr.mxu0 0.0
    %1041 = vmatpush1.msra.mxu0 %v91
    %1042 = vmatprep.subr.mxu0 0.0
    %1043 = vmatpush1.msra.mxu0 %v92
    %1044 = vmatprep.subr.mxu0 0.0
    %1045 = vmatpush1.msra.mxu0 %v93
    %1046 = vmatprep.subr.mxu0 0.0
    %1047 = vmatpush1.msra.mxu0 %v94
    %1048 = vmatprep.subr.mxu0 0.0
    %1049 = vmatpush1.msra.mxu0 %v95
    %1050 = vmatprep.subr.mxu0 0.0
    %1051 = vmatpush1.msra.mxu0 %v96
    %1052 = vmatprep.subr.mxu0 0.0
    %1053 = vmatpush1.msra.mxu0 %v97
    %1054 = vmatprep.subr.mxu0 0.0
    %1055 = vmatpush1.msra.mxu0 %v98
    %1056 = vmatprep.subr.mxu0 0.0
    %1057 = vmatpush1.msra.mxu0 %v99
    %1058 = vmatprep.subr.mxu0 0.0
    %1059 = vmatpush1.msra.mxu0 %v100
    %1060 = vmatprep.subr.mxu0 0.0
    %1061 = vmatpush1.msra.mxu0 0.0
    %1062 = vmatprep.subr.mxu0 0.0
    %1063 = vmatpush1.msra.mxu0 0.0
    %1064 = vmatprep.subr.mxu0 0.0
    %1065 = vmatpush1.msra.mxu0 0.0
    %1066 = vmatprep.subr.mxu0 0.0
    %1067 = vmatpush1.msra.mxu0 0.0
    %1068 = vmatprep.subr.mxu0 0.0
    %1069 = vmatpush1.msra.mxu0 0.0
    %1070 = vmatprep.subr.mxu0 0.0
    %1071 = vmatpush1.msra.mxu0 0.0
    %1072 = vmatprep.subr.mxu0 0.0
    %1073 = vmatpush1.msra.mxu0 0.0
    %1074 = vmatprep.subr.mxu0 0.0
    %1075 = vmatpush1.msra.mxu0 0.0
    %1076 = vmatprep.subr.mxu0 0.0
    %1077 = vmatpush1.msra.mxu0 0.0
    %1078 = vmatprep.subr.mxu0 0.0
    %1079 = vmatpush1.msra.mxu0 0.0
    %1080 = vmatprep.subr.mxu0 0.0
    %1081 = vmatpush1.msra.mxu0 0.0
    %1082 = vmatprep.subr.mxu0 0.0
    %1083 = vmatpush1.msra.mxu0 0.0
    %1084 = vmatprep.subr.mxu0 0.0
    %1085 = vmatpush1.msra.mxu0 0.0
    %1086 = vmatprep.subr.mxu0 0.0
    %1087 = vmatpush1.msra.mxu0 0.0
    %1088 = vmatprep.subr.mxu0 0.0
    %1089 = vmatpush1.msra.mxu0 0.0
    %1090 = vmatprep.subr.mxu0 0.0
    %1091 = vmatpush1.msra.mxu0 0.0
    %1092 = vmatprep.mubr.f32.mxu0 0.0
    %1093 = vmatmul.mubr.f32.gmra.mrb[0].mxu0 %v1026
    %v1094 = vpop.f32.mrb[0].mxu0
    %v1095 = vadd.f32 %v113, %v1094
    %v1096 = vpop.f32.mrb[0].mxu0
    %1097 = vdwg.mxu0
    %v1098 = vtanh.pop %v1095
    %v1100 = vsel %vm192, %v1098, 0
    %1102 = vmatprep.subr.mxu0 0.0
    %1103 = vmatpush1.msra.mxu0 %v102
    %1104 = vmatprep.subr.mxu0 0.0
    %1105 = vmatpush1.msra.mxu0 %v103
    %1106 = vmatprep.subr.mxu0 0.0
    %1107 = vmatpush1.msra.mxu0 %v104
    %1108 = vmatprep.subr.mxu0 0.0
    %1109 = vmatpush1.msra.mxu0 %v105
    %1110 = vmatprep.subr.mxu0 0.0
    %1111 = vmatpush1.msra.mxu0 0.0
    %1112 = vmatprep.subr.mxu0 0.0
    %1113 = vmatpush1.msra.mxu0 0.0
    %1114 = vmatprep.subr.mxu0 0.0
    %1115 = vmatpush1.msra.mxu0 0.0
    %1116 = vmatprep.subr.mxu0 0.0
    %1117 = vmatpush1.msra.mxu0 0.0
    %1118 = vmatprep.subr.mxu0 0.0
    %1119 = vmatpush1.msra.mxu0 0.0
    %1120 = vmatprep.subr.mxu0 0.0
    %1121 = vmatpush1.msra.mxu0 0.0
    %1122 = vmatprep.subr.mxu0 0.0
    %1123 = vmatpush1.msra.mxu0 0.0
    %1124 = vmatprep.subr.mxu0 0.0
    %1125 = vmatpush1.msra.mxu0 0.0
    %1126 = vmatprep.subr.mxu0 0.0
    %1127 = vmatpush1.msra.mxu0 0.0
    %1128 = vmatprep.subr.mxu0 0.0
    %1129 = vmatpush1.msra.mxu0 0.0
    %1130 = vmatprep.subr.mxu0 0.0
    %1131 = vmatpush1.msra.mxu0 0.0
    %1132 = vmatprep.subr.mxu0 0.0
    %1133 = vmatpush1.msra.mxu0 0.0
    %1134 = vmatprep.subr.mxu0 0.0
    %1135 = vmatpush1.msra.mxu0 0.0
    %1136 = vmatprep.subr.mxu0 0.0
    %1137 = vmatpush1.msra.mxu0 0.0
    %1138 = vmatprep.subr.mxu0 0.0
    %1139 = vmatpush1.msra.mxu0 0.0
    %1140 = vmatprep.subr.mxu0 0.0
    %1141 = vmatpush1.msra.mxu0 0.0
    %1142 = vmatprep.subr.mxu0 0.0
    %1143 = vmatpush1.msra.mxu0 0.0
    %1144 = vmatprep.subr.mxu0 0.0
    %1145 = vmatpush1.msra.mxu0 0.0
    %1146 = vmatprep.subr.mxu0 0.0
    %1147 = vmatpush1.msra.mxu0 0.0
    %1148 = vmatprep.subr.mxu0 0.0
    %1149 = vmatpush1.msra.mxu0 0.0
    %1150 = vmatprep.subr.mxu0 0.0
    %1151 = vmatpush1.msra.mxu0 0.0
    %1152 = vmatprep.subr.mxu0 0.0
    %1153 = vmatpush1.msra.mxu0 0.0
    %1154 = vmatprep.subr.mxu0 0.0
    %1155 = vmatpush1.msra.mxu0 0.0
    %1156 = vmatprep.subr.mxu0 0.0
    %1157 = vmatpush1.msra.mxu0 0.0
    %1158 = vmatprep.subr.mxu0 0.0
    %1159 = vmatpush1.msra.mxu0 0.0
    %1160 = vmatprep.subr.mxu0 0.0
    %1161 = vmatpush1.msra.mxu0 0.0
    %1162 = vmatprep.subr.mxu0 0.0
    %1163 = vmatpush1.msra.mxu0 0.0
    %1164 = vmatprep.subr.mxu0 0.0
    %1165 = vmatpush1.msra.mxu0 0.0
    %1166 = vmatprep.mubr.f32.mxu0 0.0
    %1167 = vmatmul.mubr.f32.gmra.mrb[0].mxu0 %v1100
    %v1168 = vpop.f32.mrb[0].mxu0
    %v1169 = vadd.f32 0.0, %v1168
    %v1170 = vpop.f32.mrb[0].mxu0
    %1171 = vdwg.mxu0
    %v1172 = vld [vmem:[#allocation2 + $0x7] sm:$0x1]
    %v1173 = vld [vmem:[#allocation2 + $0xf] sm:$0x1]
    %v1176 = vrot.slane %v1173, 7
    %v1177 = vsel %vm118, %v1176, %v1172
    %1179 = vmatprep.subr.mxu0 0.0
    %1180 = vmatpush1.msra.mxu0 %v85
    %1181 = vmatprep.subr.mxu0 0.0
    %1182 = vmatpush1.msra.mxu0 %v86
    %1183 = vmatprep.subr.mxu0 0.0
    %1184 = vmatpush1.msra.mxu0 %v87
    %1185 = vmatprep.subr.mxu0 0.0
    %1186 = vmatpush1.msra.mxu0 %v88
    %1187 = vmatprep.subr.mxu0 0.0
    %1188 = vmatpush1.msra.mxu0 %v89
    %1189 = vmatprep.subr.mxu0 0.0
    %1190 = vmatpush1.msra.mxu0 %v90
    %1191 = vmatprep.subr.mxu0 0.0
    %1192 = vmatpush1.msra.mxu0 %v91
    %1193 = vmatprep.subr.mxu0 0.0
    %1194 = vmatpush1.msra.mxu0 %v92
    %1195 = vmatprep.subr.mxu0 0.0
    %1196 = vmatpush1.msra.mxu0 %v93
    %1197 = vmatprep.subr.mxu0 0.0
    %1198 = vmatpush1.msra.mxu0 %v94
    %1199 = vmatprep.subr.mxu0 0.0
    %1200 = vmatpush1.msra.mxu0 %v95
    %1201 = vmatprep.subr.mxu0 0.0
    %1202 = vmatpush1.msra.mxu0 %v96
    %1203 = vmatprep.subr.mxu0 0.0
    %1204 = vmatpush1.msra.mxu0 %v97
    %1205 = vmatprep.subr.mxu0 0.0
    %1206 = vmatpush1.msra.mxu0 %v98
    %1207 = vmatprep.subr.mxu0 0.0
    %1208 = vmatpush1.msra.mxu0 %v99
    %1209 = vmatprep.subr.mxu0 0.0
    %1210 = vmatpush1.msra.mxu0 %v100
    %1211 = vmatprep.subr.mxu0 0.0
    %1212 = vmatpush1.msra.mxu0 0.0
    %1213 = vmatprep.subr.mxu0 0.0
    %1214 = vmatpush1.msra.mxu0 0.0
    %1215 = vmatprep.subr.mxu0 0.0
    %1216 = vmatpush1.msra.mxu0 0.0
    %1217 = vmatprep.subr.mxu0 0.0
    %1218 = vmatpush1.msra.mxu0 0.0
    %1219 = vmatprep.subr.mxu0 0.0
    %1220 = vmatpush1.msra.mxu0 0.0
    %1221 = vmatprep.subr.mxu0 0.0
    %1222 = vmatpush1.msra.mxu0 0.0
    %1223 = vmatprep.subr.mxu0 0.0
    %1224 = vmatpush1.msra.mxu0 0.0
    %1225 = vmatprep.subr.mxu0 0.0
    %1226 = vmatpush1.msra.mxu0 0.0
    %1227 = vmatprep.subr.mxu0 0.0
    %1228 = vmatpush1.msra.mxu0 0.0
    %1229 = vmatprep.subr.mxu0 0.0
    %1230 = vmatpush1.msra.mxu0 0.0
    %1231 = vmatprep.subr.mxu0 0.0
    %1232 = vmatpush1.msra.mxu0 0.0
    %1233 = vmatprep.subr.mxu0 0.0
    %1234 = vmatpush1.msra.mxu0 0.0
    %1235 = vmatprep.subr.mxu0 0.0
    %1236 = vmatpush1.msra.mxu0 0.0
    %1237 = vmatprep.subr.mxu0 0.0
    %1238 = vmatpush1.msra.mxu0 0.0
    %1239 = vmatprep.subr.mxu0 0.0
    %1240 = vmatpush1.msra.mxu0 0.0
    %1241 = vmatprep.subr.mxu0 0.0
    %1242 = vmatpush1.msra.mxu0 0.0
    %1243 = vmatprep.mubr.f32.mxu0 0.0
    %1244 = vmatmul.mubr.f32.gmra.mrb[0].mxu0 %v1177
    %v1245 = vpop.f32.mrb[0].mxu0
    %v1246 = vadd.f32 %v113, %v1245
    %v1247 = vpop.f32.mrb[0].mxu0
    %1248 = vdwg.mxu0
    %v1249 = vtanh.pop %v1246
    %v1251 = vsel %vm192, %v1249, 0
    %1253 = vmatprep.subr.mxu0 0.0
    %1254 = vmatpush1.msra.mxu0 %v102
    %1255 = vmatprep.subr.mxu0 0.0
    %1256 = vmatpush1.msra.mxu0 %v103
    %1257 = vmatprep.subr.mxu0 0.0
    %1258 = vmatpush1.msra.mxu0 %v104
    %1259 = vmatprep.subr.mxu0 0.0
    %1260 = vmatpush1.msra.mxu0 %v105
    %1261 = vmatprep.subr.mxu0 0.0
    %1262 = vmatpush1.msra.mxu0 0.0
    %1263 = vmatprep.subr.mxu0 0.0
    %1264 = vmatpush1.msra.mxu0 0.0
    %1265 = vmatprep.subr.mxu0 0.0
    %1266 = vmatpush1.msra.mxu0 0.0
    %1267 = vmatprep.subr.mxu0 0.0
    %1268 = vmatpush1.msra.mxu0 0.0
    %1269 = vmatprep.subr.mxu0 0.0
    %1270 = vmatpush1.msra.mxu0 0.0
    %1271 = vmatprep.subr.mxu0 0.0
    %1272 = vmatpush1.msra.mxu0 0.0
    %1273 = vmatprep.subr.mxu0 0.0
    %1274 = vmatpush1.msra.mxu0 0.0
    %1275 = vmatprep.subr.mxu0 0.0
    %1276 = vmatpush1.msra.mxu0 0.0
    %1277 = vmatprep.subr.mxu0 0.0
    %1278 = vmatpush1.msra.mxu0 0.0
    %1279 = vmatprep.subr.mxu0 0.0
    %1280 = vmatpush1.msra.mxu0 0.0
    %1281 = vmatprep.subr.mxu0 0.0
    %1282 = vmatpush1.msra.mxu0 0.0
    %1283 = vmatprep.subr.mxu0 0.0
    %1284 = vmatpush1.msra.mxu0 0.0
    %1285 = vmatprep.subr.mxu0 0.0
    %1286 = vmatpush1.msra.mxu0 0.0
    %1287 = vmatprep.subr.mxu0 0.0
    %1288 = vmatpush1.msra.mxu0 0.0
    %1289 = vmatprep.subr.mxu0 0.0
    %1290 = vmatpush1.msra.mxu0 0.0
    %1291 = vmatprep.subr.mxu0 0.0
    %1292 = vmatpush1.msra.mxu0 0.0
    %1293 = vmatprep.subr.mxu0 0.0
    %1294 = vmatpush1.msra.mxu0 0.0
    %1295 = vmatprep.subr.mxu0 0.0
    %1296 = vmatpush1.msra.mxu0 0.0
    %1297 = vmatprep.subr.mxu0 0.0
    %1298 = vmatpush1.msra.mxu0 0.0
    %1299 = vmatprep.subr.mxu0 0.0
    %1300 = vmatpush1.msra.mxu0 0.0
    %1301 = vmatprep.subr.mxu0 0.0
    %1302 = vmatpush1.msra.mxu0 0.0
    %1303 = vmatprep.subr.mxu0 0.0
    %1304 = vmatpush1.msra.mxu0 0.0
    %1305 = vmatprep.subr.mxu0 0.0
    %1306 = vmatpush1.msra.mxu0 0.0
    %1307 = vmatprep.subr.mxu0 0.0
    %1308 = vmatpush1.msra.mxu0 0.0
    %1309 = vmatprep.subr.mxu0 0.0
    %1310 = vmatpush1.msra.mxu0 0.0
    %1311 = vmatprep.subr.mxu0 0.0
    %1312 = vmatpush1.msra.mxu0 0.0
    %1313 = vmatprep.subr.mxu0 0.0
    %1314 = vmatpush1.msra.mxu0 0.0
    %1315 = vmatprep.subr.mxu0 0.0
    %1316 = vmatpush1.msra.mxu0 0.0
    %1317 = vmatprep.mubr.f32.mxu0 0.0
    %1318 = vmatmul.mubr.f32.gmra.mrb[0].mxu0 %v1251
    %v1319 = vpop.f32.mrb[0].mxu0
    %v1320 = vadd.f32 0.0, %v1319
    %v1321 = vpop.f32.mrb[0].mxu0
    %1322 = vdwg.mxu0
    %v1323 = vmax.f32 %v263, %v414
    %v1324 = vmax.f32 %v1323, %v565
    %v1325 = vmax.f32 %v1324, %v716
    %v1326 = vmax.f32 %v1325, %v867
    %v1327 = vmax.f32 %v1326, %v1018
    %v1328 = vmax.f32 %v1327, %v1169
    %v1329 = vmax.f32 %v1328, %v1320
    %v1330 = vsub.f32 %v263, %v1329
    %v1331 = vmul.f32 %v1330, 1.442695
    %v1332 = vpow.pop %v1331
    %v1333 = vsub.f32 %v414, %v1329
    %v1334 = vmul.f32 %v1333, 1.442695
    %v1335 = vpow.pop %v1334
    %v1336 = vsub.f32 %v565, %v1329
    %v1337 = vmul.f32 %v1336, 1.442695
    %v1338 = vpow.pop %v1337
    %v1339 = vsub.f32 %v716, %v1329
    %v1340 = vmul.f32 %v1339, 1.442695
    %v1341 = vpow.pop %v1340
    %v1342 = vsub.f32 %v867, %v1329
    %v1343 = vmul.f32 %v1342, 1.442695
    %v1344 = vpow.pop %v1343
    %v1345 = vsub.f32 %v1018, %v1329
    %v1346 = vmul.f32 %v1345, 1.442695
    %v1347 = vpow.pop %v1346
    %v1348 = vsub.f32 %v1169, %v1329
    %v1349 = vmul.f32 %v1348, 1.442695
    %v1350 = vpow.pop %v1349
    %v1351 = vsub.f32 %v1320, %v1329
    %v1352 = vmul.f32 %v1351, 1.442695
    %v1353 = vpow.pop %v1352
    %v1354 = vadd.f32 %v1332, %v1335
    %v1355 = vadd.f32 %v1354, %v1338
    %v1356 = vadd.f32 %v1355, %v1341
    %v1357 = vadd.f32 %v1356, %v1344
    %v1358 = vadd.f32 %v1357, %v1347
    %v1359 = vadd.f32 %v1358, %v1350
    %v1360 = vadd.f32 %v1359, %v1353
    %v1361 = vrcp.pop %v1360
    %v1362 = vmul.f32 %v1332, %v1361
    %vm1363 = vcmask 31744
    %v1365 = vsel %vm1363, %v1362, 0
    %vm1367 = vcmask 1043456
    %v1369 = vsel %vm1367, %v106, 0
    %1371 = vmatprep.subr.mxu0 0.0
    %1372 = vmatpush1.msra.mxu0 %v1369
    %1373 = vmatprep.subr.mxu0 0.0
    %1374 = vmatpush1.msra.mxu0 0.0
    %1375 = vmatprep.subr.mxu0 0.0
    %1376 = vmatpush1.msra.mxu0 0.0
    %1377 = vmatprep.subr.mxu0 0.0
    %1378 = vmatpush1.msra.mxu0 0.0
    %1379 = vmatprep.subr.mxu0 0.0
    %1380 = vmatpush1.msra.mxu0 0.0
    %1381 = vmatprep.subr.mxu0 0.0
    %1382 = vmatpush1.msra.mxu0 0.0
    %1383 = vmatprep.subr.mxu0 0.0
    %1384 = vmatpush1.msra.mxu0 0.0
    %1385 = vmatprep.subr.mxu0 0.0
    %1386 = vmatpush1.msra.mxu0 0.0
    %1387 = vmatprep.subr.mxu0 0.0
    %1388 = vmatpush1.msra.mxu0 0.0
    %1389 = vmatprep.subr.mxu0 0.0
    %1390 = vmatpush1.msra.mxu0 0.0
    %1391 = vmatprep.subr.mxu0 0.0
    %1392 = vmatpush1.msra.mxu0 0.0
    %1393 = vmatprep.subr.mxu0 0.0
    %1394 = vmatpush1.msra.mxu0 0.0
    %1395 = vmatprep.subr.mxu0 0.0
    %1396 = vmatpush1.msra.mxu0 0.0
    %1397 = vmatprep.subr.mxu0 0.0
    %1398 = vmatpush1.msra.mxu0 0.0
    %1399 = vmatprep.subr.mxu0 0.0
    %1400 = vmatpush1.msra.mxu0 0.0
    %1401 = vmatprep.subr.mxu0 0.0
    %1402 = vmatpush1.msra.mxu0 0.0
    %1403 = vmatprep.subr.mxu0 0.0
    %1404 = vmatpush1.msra.mxu0 0.0
    %1405 = vmatprep.subr.mxu0 0.0
    %1406 = vmatpush1.msra.mxu0 0.0
    %1407 = vmatprep.subr.mxu0 0.0
    %1408 = vmatpush1.msra.mxu0 0.0
    %1409 = vmatprep.subr.mxu0 0.0
    %1410 = vmatpush1.msra.mxu0 0.0
    %1411 = vmatprep.subr.mxu0 0.0
    %1412 = vmatpush1.msra.mxu0 0.0
    %1413 = vmatprep.subr.mxu0 0.0
    %1414 = vmatpush1.msra.mxu0 0.0
    %1415 = vmatprep.subr.mxu0 0.0
    %1416 = vmatpush1.msra.mxu0 0.0
    %1417 = vmatprep.subr.mxu0 0.0
    %1418 = vmatpush1.msra.mxu0 0.0
    %1419 = vmatprep.subr.mxu0 0.0
    %1420 = vmatpush1.msra.mxu0 0.0
    %1421 = vmatprep.subr.mxu0 0.0
    %1422 = vmatpush1.msra.mxu0 0.0
    %1423 = vmatprep.subr.mxu0 0.0
    %1424 = vmatpush1.msra.mxu0 0.0
    %1425 = vmatprep.subr.mxu0 0.0
    %1426 = vmatpush1.msra.mxu0 0.0
    %1427 = vmatprep.subr.mxu0 0.0
    %1428 = vmatpush1.msra.mxu0 0.0
    %1429 = vmatprep.subr.mxu0 0.0
    %1430 = vmatpush1.msra.mxu0 0.0
    %1431 = vmatprep.subr.mxu0 0.0
    %1432 = vmatpush1.msra.mxu0 0.0
    %1433 = vmatprep.subr.mxu0 0.0
    %1434 = vmatpush1.msra.mxu0 0.0
    %1435 = vmatprep.mubr.f32.mxu0 0.0
    %1436 = vmatmul.mubr.f32.gmra.mrb[0].mxu0 %v1365
    %v1437 = vpop.f32.mrb[0].mxu0
    %v1438 = vadd.f32 0.0, %v1437
    %v1439 = vpop.f32.mrb[0].mxu0
    %1440 = vdwg.mxu0
    %v1441 = vmul.f32 %v1438, %v119
    %v1442 = vadd.f32 %v1441, 0.0
    %v1443 = vmul.f32 %v1335, %v1361
    %v1445 = vsel %vm1363, %v1443, 0
    %1447 = vmatprep.subr.mxu0 0.0
    %1448 = vmatpush1.msra.mxu0 %v1369
    %1449 = vmatprep.subr.mxu0 0.0
    %1450 = vmatpush1.msra.mxu0 0.0
    %1451 = vmatprep.subr.mxu0 0.0
    %1452 = vmatpush1.msra.mxu0 0.0
    %1453 = vmatprep.subr.mxu0 0.0
    %1454 = vmatpush1.msra.mxu0 0.0
    %1455 = vmatprep.subr.mxu0 0.0
    %1456 = vmatpush1.msra.mxu0 0.0
    %1457 = vmatprep.subr.mxu0 0.0
    %1458 = vmatpush1.msra.mxu0 0.0
    %1459 = vmatprep.subr.mxu0 0.0
    %1460 = vmatpush1.msra.mxu0 0.0
    %1461 = vmatprep.subr.mxu0 0.0
    %1462 = vmatpush1.msra.mxu0 0.0
    %1463 = vmatprep.subr.mxu0 0.0
    %1464 = vmatpush1.msra.mxu0 0.0
    %1465 = vmatprep.subr.mxu0 0.0
    %1466 = vmatpush1.msra.mxu0 0.0
    %1467 = vmatprep.subr.mxu0 0.0
    %1468 = vmatpush1.msra.mxu0 0.0
    %1469 = vmatprep.subr.mxu0 0.0
    %1470 = vmatpush1.msra.mxu0 0.0
    %1471 = vmatprep.subr.mxu0 0.0
    %1472 = vmatpush1.msra.mxu0 0.0
    %1473 = vmatprep.subr.mxu0 0.0
    %1474 = vmatpush1.msra.mxu0 0.0
    %1475 = vmatprep.subr.mxu0 0.0
    %1476 = vmatpush1.msra.mxu0 0.0
    %1477 = vmatprep.subr.mxu0 0.0
    %1478 = vmatpush1.msra.mxu0 0.0
    %1479 = vmatprep.subr.mxu0 0.0
    %1480 = vmatpush1.msra.mxu0 0.0
    %1481 = vmatprep.subr.mxu0 0.0
    %1482 = vmatpush1.msra.mxu0 0.0
    %1483 = vmatprep.subr.mxu0 0.0
    %1484 = vmatpush1.msra.mxu0 0.0
    %1485 = vmatprep.subr.mxu0 0.0
    %1486 = vmatpush1.msra.mxu0 0.0
    %1487 = vmatprep.subr.mxu0 0.0
    %1488 = vmatpush1.msra.mxu0 0.0
    %1489 = vmatprep.subr.mxu0 0.0
    %1490 = vmatpush1.msra.mxu0 0.0
    %1491 = vmatprep.subr.mxu0 0.0
    %1492 = vmatpush1.msra.mxu0 0.0
    %1493 = vmatprep.subr.mxu0 0.0
    %1494 = vmatpush1.msra.mxu0 0.0
    %1495 = vmatprep.subr.mxu0 0.0
    %1496 = vmatpush1.msra.mxu0 0.0
    %1497 = vmatprep.subr.mxu0 0.0
    %1498 = vmatpush1.msra.mxu0 0.0
    %1499 = vmatprep.subr.mxu0 0.0
    %1500 = vmatpush1.msra.mxu0 0.0
    %1501 = vmatprep.subr.mxu0 0.0
    %1502 = vmatpush1.msra.mxu0 0.0
    %1503 = vmatprep.subr.mxu0 0.0
    %1504 = vmatpush1.msra.mxu0 0.0
    %1505 = vmatprep.subr.mxu0 0.0
    %1506 = vmatpush1.msra.mxu0 0.0
    %1507 = vmatprep.subr.mxu0 0.0
    %1508 = vmatpush1.msra.mxu0 0.0
    %1509 = vmatprep.subr.mxu0 0.0
    %1510 = vmatpush1.msra.mxu0 0.0
    %1511 = vmatprep.mubr.f32.mxu0 0.0
    %1512 = vmatmul.mubr.f32.gmra.mrb[0].mxu0 %v1445
    %v1513 = vpop.f32.mrb[0].mxu0
    %v1514 = vadd.f32 0.0, %v1513
    %v1515 = vpop.f32.mrb[0].mxu0
    %1516 = vdwg.mxu0
    %v1517 = vmul.f32 %v1514, %v271
    %v1518 = vadd.f32 %v1442, %v1517
    %v1519 = vmul.f32 %v1338, %v1361
    %v1521 = vsel %vm1363, %v1519, 0
    %1523 = vmatprep.subr.mxu0 0.0
    %1524 = vmatpush1.msra.mxu0 %v1369
    %1525 = vmatprep.subr.mxu0 0.0
    %1526 = vmatpush1.msra.mxu0 0.0
    %1527 = vmatprep.subr.mxu0 0.0
    %1528 = vmatpush1.msra.mxu0 0.0
    %1529 = vmatprep.subr.mxu0 0.0
    %1530 = vmatpush1.msra.mxu0 0.0
    %1531 = vmatprep.subr.mxu0 0.0
    %1532 = vmatpush1.msra.mxu0 0.0
    %1533 = vmatprep.subr.mxu0 0.0
    %1534 = vmatpush1.msra.mxu0 0.0
    %1535 = vmatprep.subr.mxu0 0.0
    %1536 = vmatpush1.msra.mxu0 0.0
    %1537 = vmatprep.subr.mxu0 0.0
    %1538 = vmatpush1.msra.mxu0 0.0
    %1539 = vmatprep.subr.mxu0 0.0
    %1540 = vmatpush1.msra.mxu0 0.0
    %1541 = vmatprep.subr.mxu0 0.0
    %1542 = vmatpush1.msra.mxu0 0.0
    %1543 = vmatprep.subr.mxu0 0.0
    %1544 = vmatpush1.msra.mxu0 0.0
    %1545 = vmatprep.subr.mxu0 0.0
    %1546 = vmatpush1.msra.mxu0 0.0
    %1547 = vmatprep.subr.mxu0 0.0
    %1548 = vmatpush1.msra.mxu0 0.0
    %1549 = vmatprep.subr.mxu0 0.0
    %1550 = vmatpush1.msra.mxu0 0.0
    %1551 = vmatprep.subr.mxu0 0.0
    %1552 = vmatpush1.msra.mxu0 0.0
    %1553 = vmatprep.subr.mxu0 0.0
    %1554 = vmatpush1.msra.mxu0 0.0
    %1555 = vmatprep.subr.mxu0 0.0
    %1556 = vmatpush1.msra.mxu0 0.0
    %1557 = vmatprep.subr.mxu0 0.0
    %1558 = vmatpush1.msra.mxu0 0.0
    %1559 = vmatprep.subr.mxu0 0.0
    %1560 = vmatpush1.msra.mxu0 0.0
    %1561 = vmatprep.subr.mxu0 0.0
    %1562 = vmatpush1.msra.mxu0 0.0
    %1563 = vmatprep.subr.mxu0 0.0
    %1564 = vmatpush1.msra.mxu0 0.0
    %1565 = vmatprep.subr.mxu0 0.0
    %1566 = vmatpush1.msra.mxu0 0.0
    %1567 = vmatprep.subr.mxu0 0.0
    %1568 = vmatpush1.msra.mxu0 0.0
    %1569 = vmatprep.subr.mxu0 0.0
    %1570 = vmatpush1.msra.mxu0 0.0
    %1571 = vmatprep.subr.mxu0 0.0
    %1572 = vmatpush1.msra.mxu0 0.0
    %1573 = vmatprep.subr.mxu0 0.0
    %1574 = vmatpush1.msra.mxu0 0.0
    %1575 = vmatprep.subr.mxu0 0.0
    %1576 = vmatpush1.msra.mxu0 0.0
    %1577 = vmatprep.subr.mxu0 0.0
    %1578 = vmatpush1.msra.mxu0 0.0
    %1579 = vmatprep.subr.mxu0 0.0
    %1580 = vmatpush1.msra.mxu0 0.0
    %1581 = vmatprep.subr.mxu0 0.0
    %1582 = vmatpush1.msra.mxu0 0.0
    %1583 = vmatprep.subr.mxu0 0.0
    %1584 = vmatpush1.msra.mxu0 0.0
    %1585 = vmatprep.subr.mxu0 0.0
    %1586 = vmatpush1.msra.mxu0 0.0
    %1587 = vmatprep.mubr.f32.mxu0 0.0
    %1588 = vmatmul.mubr.f32.gmra.mrb[0].mxu0 %v1521
    %v1589 = vpop.f32.mrb[0].mxu0
    %v1590 = vadd.f32 0.0, %v1589
    %v1591 = vpop.f32.mrb[0].mxu0
    %1592 = vdwg.mxu0
    %v1593 = vmul.f32 %v1590, %v422
    %v1594 = vadd.f32 %v1518, %v1593
    %v1595 = vmul.f32 %v1341, %v1361
    %v1597 = vsel %vm1363, %v1595, 0
    %1599 = vmatprep.subr.mxu0 0.0
    %1600 = vmatpush1.msra.mxu0 %v1369
    %1601 = vmatprep.subr.mxu0 0.0
    %1602 = vmatpush1.msra.mxu0 0.0
    %1603 = vmatprep.subr.mxu0 0.0
    %1604 = vmatpush1.msra.mxu0 0.0
    %1605 = vmatprep.subr.mxu0 0.0
    %1606 = vmatpush1.msra.mxu0 0.0
    %1607 = vmatprep.subr.mxu0 0.0
    %1608 = vmatpush1.msra.mxu0 0.0
    %1609 = vmatprep.subr.mxu0 0.0
    %1610 = vmatpush1.msra.mxu0 0.0
    %1611 = vmatprep.subr.mxu0 0.0
    %1612 = vmatpush1.msra.mxu0 0.0
    %1613 = vmatprep.subr.mxu0 0.0
    %1614 = vmatpush1.msra.mxu0 0.0
    %1615 = vmatprep.subr.mxu0 0.0
    %1616 = vmatpush1.msra.mxu0 0.0
    %1617 = vmatprep.subr.mxu0 0.0
    %1618 = vmatpush1.msra.mxu0 0.0
    %1619 = vmatprep.subr.mxu0 0.0
    %1620 = vmatpush1.msra.mxu0 0.0
    %1621 = vmatprep.subr.mxu0 0.0
    %1622 = vmatpush1.msra.mxu0 0.0
    %1623 = vmatprep.subr.mxu0 0.0
    %1624 = vmatpush1.msra.mxu0 0.0
    %1625 = vmatprep.subr.mxu0 0.0
    %1626 = vmatpush1.msra.mxu0 0.0
    %1627 = vmatprep.subr.mxu0 0.0
    %1628 = vmatpush1.msra.mxu0 0.0
    %1629 = vmatprep.subr.mxu0 0.0
    %1630 = vmatpush1.msra.mxu0 0.0
    %1631 = vmatprep.subr.mxu0 0.0
    %1632 = vmatpush1.msra.mxu0 0.0
    %1633 = vmatprep.subr.mxu0 0.0
    %1634 = vmatpush1.msra.mxu0 0.0
    %1635 = vmatprep.subr.mxu0 0.0
    %1636 = vmatpush1.msra.mxu0 0.0
    %1637 = vmatprep.subr.mxu0 0.0
    %1638 = vmatpush1.msra.mxu0 0.0
    %1639 = vmatprep.subr.mxu0 0.0
    %1640 = vmatpush1.msra.mxu0 0.0
    %1641 = vmatprep.subr.mxu0 0.0
    %1642 = vmatpush1.msra.mxu0 0.0
    %1643 = vmatprep.subr.mxu0 0.0
    %1644 = vmatpush1.msra.mxu0 0.0
    %1645 = vmatprep.subr.mxu0 0.0
    %1646 = vmatpush1.msra.mxu0 0.0
    %1647 = vmatprep.subr.mxu0 0.0
    %1648 = vmatpush1.msra.mxu0 0.0
    %1649 = vmatprep.subr.mxu0 0.0
    %1650 = vmatpush1.msra.mxu0 0.0
    %1651 = vmatprep.subr.mxu0 0.0
    %1652 = vmatpush1.msra.mxu0 0.0
    %1653 = vmatprep.subr.mxu0 0.0
    %1654 = vmatpush1.msra.mxu0 0.0
    %1655 = vmatprep.subr.mxu0 0.0
    %1656 = vmatpush1.msra.mxu0 0.0
    %1657 = vmatprep.subr.mxu0 0.0
    %1658 = vmatpush1.msra.mxu0 0.0
    %1659 = vmatprep.subr.mxu0 0.0
    %1660 = vmatpush1.msra.mxu0 0.0
    %1661 = vmatprep.subr.mxu0 0.0
    %1662 = vmatpush1.msra.mxu0 0.0
    %1663 = vmatprep.mubr.f32.mxu0 0.0
    %1664 = vmatmul.mubr.f32.gmra.mrb[0].mxu0 %v1597
    %v1665 = vpop.f32.mrb[0].mxu0
    %v1666 = vadd.f32 0.0, %v1665
    %v1667 = vpop.f32.mrb[0].mxu0
    %1668 = vdwg.mxu0
    %v1669 = vmul.f32 %v1666, %v573
    %v1670 = vadd.f32 %v1594, %v1669
    %v1671 = vmul.f32 %v1344, %v1361
    %v1673 = vsel %vm1363, %v1671, 0
    %1675 = vmatprep.subr.mxu0 0.0
    %1676 = vmatpush1.msra.mxu0 %v1369
    %1677 = vmatprep.subr.mxu0 0.0
    %1678 = vmatpush1.msra.mxu0 0.0
    %1679 = vmatprep.subr.mxu0 0.0
    %1680 = vmatpush1.msra.mxu0 0.0
    %1681 = vmatprep.subr.mxu0 0.0
    %1682 = vmatpush1.msra.mxu0 0.0
    %1683 = vmatprep.subr.mxu0 0.0
    %1684 = vmatpush1.msra.mxu0 0.0
    %1685 = vmatprep.subr.mxu0 0.0
    %1686 = vmatpush1.msra.mxu0 0.0
    %1687 = vmatprep.subr.mxu0 0.0
    %1688 = vmatpush1.msra.mxu0 0.0
    %1689 = vmatprep.subr.mxu0 0.0
    %1690 = vmatpush1.msra.mxu0 0.0
    %1691 = vmatprep.subr.mxu0 0.0
    %1692 = vmatpush1.msra.mxu0 0.0
    %1693 = vmatprep.subr.mxu0 0.0
    %1694 = vmatpush1.msra.mxu0 0.0
    %1695 = vmatprep.subr.mxu0 0.0
    %1696 = vmatpush1.msra.mxu0 0.0
    %1697 = vmatprep.subr.mxu0 0.0
    %1698 = vmatpush1.msra.mxu0 0.0
    %1699 = vmatprep.subr.mxu0 0.0
    %1700 = vmatpush1.msra.mxu0 0.0
    %1701 = vmatprep.subr.mxu0 0.0
    %1702 = vmatpush1.msra.mxu0 0.0
    %1703 = vmatprep.subr.mxu0 0.0
    %1704 = vmatpush1.msra.mxu0 0.0
    %1705 = vmatprep.subr.mxu0 0.0
    %1706 = vmatpush1.msra.mxu0 0.0
    %1707 = vmatprep.subr.mxu0 0.0
    %1708 = vmatpush1.msra.mxu0 0.0
    %1709 = vmatprep.subr.mxu0 0.0
    %1710 = vmatpush1.msra.mxu0 0.0
    %1711 = vmatprep.subr.mxu0 0.0
    %1712 = vmatpush1.msra.mxu0 0.0
    %1713 = vmatprep.subr.mxu0 0.0
    %1714 = vmatpush1.msra.mxu0 0.0
    %1715 = vmatprep.subr.mxu0 0.0
    %1716 = vmatpush1.msra.mxu0 0.0
    %1717 = vmatprep.subr.mxu0 0.0
    %1718 = vmatpush1.msra.mxu0 0.0
    %1719 = vmatprep.subr.mxu0 0.0
    %1720 = vmatpush1.msra.mxu0 0.0
    %1721 = vmatprep.subr.mxu0 0.0
    %1722 = vmatpush1.msra.mxu0 0.0
    %1723 = vmatprep.subr.mxu0 0.0
    %1724 = vmatpush1.msra.mxu0 0.0
    %1725 = vmatprep.subr.mxu0 0.0
    %1726 = vmatpush1.msra.mxu0 0.0
    %1727 = vmatprep.subr.mxu0 0.0
    %1728 = vmatpush1.msra.mxu0 0.0
    %1729 = vmatprep.subr.mxu0 0.0
    %1730 = vmatpush1.msra.mxu0 0.0
    %1731 = vmatprep.subr.mxu0 0.0
    %1732 = vmatpush1.msra.mxu0 0.0
    %1733 = vmatprep.subr.mxu0 0.0
    %1734 = vmatpush1.msra.mxu0 0.0
    %1735 = vmatprep.subr.mxu0 0.0
    %1736 = vmatpush1.msra.mxu0 0.0
    %1737 = vmatprep.subr.mxu0 0.0
    %1738 = vmatpush1.msra.mxu0 0.0
    %1739 = vmatprep.mubr.f32.mxu0 0.0
    %1740 = vmatmul.mubr.f32.gmra.mrb[0].mxu0 %v1673
    %v1741 = vpop.f32.mrb[0].mxu0
    %v1742 = vadd.f32 0.0, %v1741
    %v1743 = vpop.f32.mrb[0].mxu0
    %1744 = vdwg.mxu0
    %v1745 = vmul.f32 %v1742, %v724
    %v1746 = vadd.f32 %v1670, %v1745
    %v1747 = vmul.f32 %v1347, %v1361
    %v1749 = vsel %vm1363, %v1747, 0
    %1751 = vmatprep.subr.mxu0 0.0
    %1752 = vmatpush1.msra.mxu0 %v1369
    %1753 = vmatprep.subr.mxu0 0.0
    %1754 = vmatpush1.msra.mxu0 0.0
    %1755 = vmatprep.subr.mxu0 0.0
    %1756 = vmatpush1.msra.mxu0 0.0
    %1757 = vmatprep.subr.mxu0 0.0
    %1758 = vmatpush1.msra.mxu0 0.0
    %1759 = vmatprep.subr.mxu0 0.0
    %1760 = vmatpush1.msra.mxu0 0.0
    %1761 = vmatprep.subr.mxu0 0.0
    %1762 = vmatpush1.msra.mxu0 0.0
    %1763 = vmatprep.subr.mxu0 0.0
    %1764 = vmatpush1.msra.mxu0 0.0
    %1765 = vmatprep.subr.mxu0 0.0
    %1766 = vmatpush1.msra.mxu0 0.0
    %1767 = vmatprep.subr.mxu0 0.0
    %1768 = vmatpush1.msra.mxu0 0.0
    %1769 = vmatprep.subr.mxu0 0.0
    %1770 = vmatpush1.msra.mxu0 0.0
    %1771 = vmatprep.subr.mxu0 0.0
    %1772 = vmatpush1.msra.mxu0 0.0
    %1773 = vmatprep.subr.mxu0 0.0
    %1774 = vmatpush1.msra.mxu0 0.0
    %1775 = vmatprep.subr.mxu0 0.0
    %1776 = vmatpush1.msra.mxu0 0.0
    %1777 = vmatprep.subr.mxu0 0.0
    %1778 = vmatpush1.msra.mxu0 0.0
    %1779 = vmatprep.subr.mxu0 0.0
    %1780 = vmatpush1.msra.mxu0 0.0
    %1781 = vmatprep.subr.mxu0 0.0
    %1782 = vmatpush1.msra.mxu0 0.0
    %1783 = vmatprep.subr.mxu0 0.0
    %1784 = vmatpush1.msra.mxu0 0.0
    %1785 = vmatprep.subr.mxu0 0.0
    %1786 = vmatpush1.msra.mxu0 0.0
    %1787 = vmatprep.subr.mxu0 0.0
    %1788 = vmatpush1.msra.mxu0 0.0
    %1789 = vmatprep.subr.mxu0 0.0
    %1790 = vmatpush1.msra.mxu0 0.0
    %1791 = vmatprep.subr.mxu0 0.0
    %1792 = vmatpush1.msra.mxu0 0.0
    %1793 = vmatprep.subr.mxu0 0.0
    %1794 = vmatpush1.msra.mxu0 0.0
    %1795 = vmatprep.subr.mxu0 0.0
    %1796 = vmatpush1.msra.mxu0 0.0
    %1797 = vmatprep.subr.mxu0 0.0
    %1798 = vmatpush1.msra.mxu0 0.0
    %1799 = vmatprep.subr.mxu0 0.0
    %1800 = vmatpush1.msra.mxu0 0.0
    %1801 = vmatprep.subr.mxu0 0.0
    %1802 = vmatpush1.msra.mxu0 0.0
    %1803 = vmatprep.subr.mxu0 0.0
    %1804 = vmatpush1.msra.mxu0 0.0
    %1805 = vmatprep.subr.mxu0 0.0
    %1806 = vmatpush1.msra.mxu0 0.0
    %1807 = vmatprep.subr.mxu0 0.0
    %1808 = vmatpush1.msra.mxu0 0.0
    %1809 = vmatprep.subr.mxu0 0.0
    %1810 = vmatpush1.msra.mxu0 0.0
    %1811 = vmatprep.subr.mxu0 0.0
    %1812 = vmatpush1.msra.mxu0 0.0
    %1813 = vmatprep.subr.mxu0 0.0
    %1814 = vmatpush1.msra.mxu0 0.0
    %1815 = vmatprep.mubr.f32.mxu0 0.0
    %1816 = vmatmul.mubr.f32.gmra.mrb[0].mxu0 %v1749
    %v1817 = vpop.f32.mrb[0].mxu0
    %v1818 = vadd.f32 0.0, %v1817
    %v1819 = vpop.f32.mrb[0].mxu0
    %1820 = vdwg.mxu0
    %v1821 = vmul.f32 %v1818, %v875
    %v1822 = vadd.f32 %v1746, %v1821
    %v1823 = vmul.f32 %v1350, %v1361
    %v1825 = vsel %vm1363, %v1823, 0
    %1827 = vmatprep.subr.mxu0 0.0
    %1828 = vmatpush1.msra.mxu0 %v1369
    %1829 = vmatprep.subr.mxu0 0.0
    %1830 = vmatpush1.msra.mxu0 0.0
    %1831 = vmatprep.subr.mxu0 0.0
    %1832 = vmatpush1.msra.mxu0 0.0
    %1833 = vmatprep.subr.mxu0 0.0
    %1834 = vmatpush1.msra.mxu0 0.0
    %1835 = vmatprep.subr.mxu0 0.0
    %1836 = vmatpush1.msra.mxu0 0.0
    %1837 = vmatprep.subr.mxu0 0.0
    %1838 = vmatpush1.msra.mxu0 0.0
    %1839 = vmatprep.subr.mxu0 0.0
    %1840 = vmatpush1.msra.mxu0 0.0
    %1841 = vmatprep.subr.mxu0 0.0
    %1842 = vmatpush1.msra.mxu0 0.0
    %1843 = vmatprep.subr.mxu0 0.0
    %1844 = vmatpush1.msra.mxu0 0.0
    %1845 = vmatprep.subr.mxu0 0.0
    %1846 = vmatpush1.msra.mxu0 0.0
    %1847 = vmatprep.subr.mxu0 0.0
    %1848 = vmatpush1.msra.mxu0 0.0
    %1849 = vmatprep.subr.mxu0 0.0
    %1850 = vmatpush1.msra.mxu0 0.0
    %1851 = vmatprep.subr.mxu0 0.0
    %1852 = vmatpush1.msra.mxu0 0.0
    %1853 = vmatprep.subr.mxu0 0.0
    %1854 = vmatpush1.msra.mxu0 0.0
    %1855 = vmatprep.subr.mxu0 0.0
    %1856 = vmatpush1.msra.mxu0 0.0
    %1857 = vmatprep.subr.mxu0 0.0
    %1858 = vmatpush1.msra.mxu0 0.0
    %1859 = vmatprep.subr.mxu0 0.0
    %1860 = vmatpush1.msra.mxu0 0.0
    %1861 = vmatprep.subr.mxu0 0.0
    %1862 = vmatpush1.msra.mxu0 0.0
    %1863 = vmatprep.subr.mxu0 0.0
    %1864 = vmatpush1.msra.mxu0 0.0
    %1865 = vmatprep.subr.mxu0 0.0
    %1866 = vmatpush1.msra.mxu0 0.0
    %1867 = vmatprep.subr.mxu0 0.0
    %1868 = vmatpush1.msra.mxu0 0.0
    %1869 = vmatprep.subr.mxu0 0.0
    %1870 = vmatpush1.msra.mxu0 0.0
    %1871 = vmatprep.subr.mxu0 0.0
    %1872 = vmatpush1.msra.mxu0 0.0
    %1873 = vmatprep.subr.mxu0 0.0
    %1874 = vmatpush1.msra.mxu0 0.0
    %1875 = vmatprep.subr.mxu0 0.0
    %1876 = vmatpush1.msra.mxu0 0.0
    %1877 = vmatprep.subr.mxu0 0.0
    %1878 = vmatpush1.msra.mxu0 0.0
    %1879 = vmatprep.subr.mxu0 0.0
    %1880 = vmatpush1.msra.mxu0 0.0
    %1881 = vmatprep.subr.mxu0 0.0
    %1882 = vmatpush1.msra.mxu0 0.0
    %1883 = vmatprep.subr.mxu0 0.0
    %1884 = vmatpush1.msra.mxu0 0.0
    %1885 = vmatprep.subr.mxu0 0.0
    %1886 = vmatpush1.msra.mxu0 0.0
    %1887 = vmatprep.subr.mxu0 0.0
    %1888 = vmatpush1.msra.mxu0 0.0
    %1889 = vmatprep.subr.mxu0 0.0
    %1890 = vmatpush1.msra.mxu0 0.0
    %1891 = vmatprep.mubr.f32.mxu0 0.0
    %1892 = vmatmul.mubr.f32.gmra.mrb[0].mxu0 %v1825
    %v1893 = vpop.f32.mrb[0].mxu0
    %v1894 = vadd.f32 0.0, %v1893
    %v1895 = vpop.f32.mrb[0].mxu0
    %1896 = vdwg.mxu0
    %v1897 = vmul.f32 %v1894, %v1026
    %v1898 = vadd.f32 %v1822, %v1897
    %v1899 = vmul.f32 %v1353, %v1361
    %v1901 = vsel %vm1363, %v1899, 0
    %1903 = vmatprep.subr.mxu0 0.0
    %1904 = vmatpush1.msra.mxu0 %v1369
    %1905 = vmatprep.subr.mxu0 0.0
    %1906 = vmatpush1.msra.mxu0 0.0
    %1907 = vmatprep.subr.mxu0 0.0
    %1908 = vmatpush1.msra.mxu0 0.0
    %1909 = vmatprep.subr.mxu0 0.0
    %1910 = vmatpush1.msra.mxu0 0.0
    %1911 = vmatprep.subr.mxu0 0.0
    %1912 = vmatpush1.msra.mxu0 0.0
    %1913 = vmatprep.subr.mxu0 0.0
    %1914 = vmatpush1.msra.mxu0 0.0
    %1915 = vmatprep.subr.mxu0 0.0
    %1916 = vmatpush1.msra.mxu0 0.0
    %1917 = vmatprep.subr.mxu0 0.0
    %1918 = vmatpush1.msra.mxu0 0.0
    %1919 = vmatprep.subr.mxu0 0.0
    %1920 = vmatpush1.msra.mxu0 0.0
    %1921 = vmatprep.subr.mxu0 0.0
    %1922 = vmatpush1.msra.mxu0 0.0
    %1923 = vmatprep.subr.mxu0 0.0
    %1924 = vmatpush1.msra.mxu0 0.0
    %1925 = vmatprep.subr.mxu0 0.0
    %1926 = vmatpush1.msra.mxu0 0.0
    %1927 = vmatprep.subr.mxu0 0.0
    %1928 = vmatpush1.msra.mxu0 0.0
    %1929 = vmatprep.subr.mxu0 0.0
    %1930 = vmatpush1.msra.mxu0 0.0
    %1931 = vmatprep.subr.mxu0 0.0
    %1932 = vmatpush1.msra.mxu0 0.0
    %1933 = vmatprep.subr.mxu0 0.0
    %1934 = vmatpush1.msra.mxu0 0.0
    %1935 = vmatprep.subr.mxu0 0.0
    %1936 = vmatpush1.msra.mxu0 0.0
    %1937 = vmatprep.subr.mxu0 0.0
    %1938 = vmatpush1.msra.mxu0 0.0
    %1939 = vmatprep.subr.mxu0 0.0
    %1940 = vmatpush1.msra.mxu0 0.0
    %1941 = vmatprep.subr.mxu0 0.0
    %1942 = vmatpush1.msra.mxu0 0.0
    %1943 = vmatprep.subr.mxu0 0.0
    %1944 = vmatpush1.msra.mxu0 0.0
    %1945 = vmatprep.subr.mxu0 0.0
    %1946 = vmatpush1.msra.mxu0 0.0
    %1947 = vmatprep.subr.mxu0 0.0
    %1948 = vmatpush1.msra.mxu0 0.0
    %1949 = vmatprep.subr.mxu0 0.0
    %1950 = vmatpush1.msra.mxu0 0.0
    %1951 = vmatprep.subr.mxu0 0.0
    %1952 = vmatpush1.msra.mxu0 0.0
    %1953 = vmatprep.subr.mxu0 0.0
    %1954 = vmatpush1.msra.mxu0 0.0
    %1955 = vmatprep.subr.mxu0 0.0
    %1956 = vmatpush1.msra.mxu0 0.0
    %1957 = vmatprep.subr.mxu0 0.0
    %1958 = vmatpush1.msra.mxu0 0.0
    %1959 = vmatprep.subr.mxu0 0.0
    %1960 = vmatpush1.msra.mxu0 0.0
    %1961 = vmatprep.subr.mxu0 0.0
    %1962 = vmatpush1.msra.mxu0 0.0
    %1963 = vmatprep.subr.mxu0 0.0
    %1964 = vmatpush1.msra.mxu0 0.0
    %1965 = vmatprep.subr.mxu0 0.0
    %1966 = vmatpush1.msra.mxu0 0.0
    %1967 = vmatprep.mubr.f32.mxu0 0.0
    %1968 = vmatmul.mubr.f32.gmra.mrb[0].mxu0 %v1901
    %v1969 = vpop.f32.mrb[0].mxu0
    %v1970 = vadd.f32 0.0, %v1969
    %v1971 = vpop.f32.mrb[0].mxu0
    %1972 = vdwg.mxu0
    %v1973 = vmul.f32 %v1970, %v1177
    %v1974 = vadd.f32 %v1898, %v1973
    %1975 = vst [vmem:[#allocation11] sm:$0x3] %v1974
    // Predicated region
    $region42: #{tpu_custom_call.1} parent=1 // pred_check
      _
    $region43: #{tpu_custom_call.1} parent=1 // pred_check_branch
      %1977 = sbr.rel (0) target = $region45
    $region44: #{tpu_custom_call.1} parent=1 // pred_region
      %s1979 = ssub.s32 32, 32
      %1980 = vsyncadd [#allocation4], %s1979
      %s1982 = sshll.u32 [#allocation11], 4
      %s1983 = int_to_ptr.vmem [resolvable:$true] %s1982
      %1985 = dma.vmem_to_hbm [thread:$0]  %s1983, 32, %s5, [#allocation4]
    $region45: #{tpu_custom_call.1} parent=1 // pred_fallthru
      _
    // Predicated region
    $region46: #{tpu_custom_call.1} parent=1 // pred_check
      _
    $region47: #{tpu_custom_call.1} parent=1 // pred_check_branch
      %1987 = sbr.rel (0) target = $region49
    $region48: #{tpu_custom_call.1} parent=1 // pred_region
      %1988 = dma.done [#allocation4], 32
    $region49: #{tpu_custom_call.1} parent=1 // pred_fallthru
      _
    %1989 = vsyncpa [#allocation3], 1
    %1990 = vsyncpa [#allocation6], 1
    %1991 = vsyncpa [#allocation9], 1
    %1992 = vsyncpa [#allocation4], 1

</llo_original>
